<compile_context>
chip_gen: v7x
topology: tpu7x:2x2x1
jax: 0.10.0
libtpu: 0.0.40
codegen_flags: <defaults>
</compile_context>

<pallas_src>
import functools

import numpy as np
import jax
import jax.numpy as jnp
from jax.experimental import pallas as pl
from jax.experimental.pallas import tpu as pltpu

_SUBLANE = 8
_LANE = 128


def _round_up(x, m):
    return ((x + m - 1) // m) * m


# -----------------------------------------------------------------------------
# Kernel: hoisted input projection + fused-gate LSTM recurrence + MLP head,
# all in one pallas_call (grid = (1,)).  h/c live in vregs across the unrolled
# time loop.
# -----------------------------------------------------------------------------
def _lstm_mlp_kernel(hseq_ref, data_ref, wih_ref, whh_ref, b_ref,
                     w1d_ref, w1h_ref, b1_ref, w2_ref, b2_ref,
                     out_ref, *, T, Bp, D):
    # Hoisted, time-independent input projection for all timesteps at once:
    # (T*Bp, D) @ (D, 4D) + (1, 4D)  ->  (T*Bp, 4D), bias folded in once.
    xw = (jnp.dot(hseq_ref[...], wih_ref[...], preferred_element_type=jnp.float32)
          + b_ref[...])

    whh = whh_ref[...]                                   # (D, 4D), loaded once
    h = jnp.zeros((Bp, D), jnp.float32)
    c = jnp.zeros((Bp, D), jnp.float32)

    # Statically unrolled recurrence (T is small); only one fused matmul
    # (h @ Whh) sits on the serial critical path per step.  Bp is a multiple
    # of 8, so the xw slices are sublane-aligned.
    for t in range(T):
        gates = xw[t * Bp:(t + 1) * Bp, :] + jnp.dot(
            h, whh, preferred_element_type=jnp.float32)          # (Bp, 4D)
        i_g = jax.nn.sigmoid(gates[:, 0 * D:1 * D])
        f_g = jax.nn.sigmoid(gates[:, 1 * D:2 * D])
        g_g = jnp.tanh(gates[:, 2 * D:3 * D])
        o_g = jax.nn.sigmoid(gates[:, 3 * D:4 * D])
        c = f_g * c + i_g * g_g
        h = o_g * jnp.tanh(c)

    # MLP head: concat([data, h_last]) @ W1 + b1 is computed as the split
    # matmul data @ W1_data + h_last @ W1_h + b1 (mathematically identical).
    # All head widths are padded to 128 lanes wrapper-side -> lane-dense tiles.
    z = (jnp.dot(data_ref[...], w1d_ref[...], preferred_element_type=jnp.float32)
         + jnp.dot(h, w1h_ref[...], preferred_element_type=jnp.float32)
         + b1_ref[...])
    hid = jnp.maximum(z, 0.0)                            # Dropout (eval) -> ReLU
    logits = jnp.dot(hid, w2_ref[...], preferred_element_type=jnp.float32) + b2_ref[...]
    out_ref[...] = logits.astype(out_ref.dtype)


def _full_spec(shape):
    ndim = len(shape)
    return pl.BlockSpec(shape, lambda i, _n=ndim: (0,) * _n)


def lstm_approximator_forward(h_sequence, data, params):
    """h_sequence: (B, T, D) float32, data: (B, Dd) float32 -> (B, L) float32."""
    B, T, D = h_sequence.shape
    L = params["b2"].shape[1]

    Bp = _round_up(max(B, 1), _SUBLANE)                  # sublane-aligned batch
    Lp = _round_up(L, _LANE)                             # lane-dense head width

    # Layout plumbing in the wrapper: batch-first -> time-major, pad batch to
    # a sublane multiple, then flatten time/batch into one (T*Bp, D) slab.
    hseq_tm = jnp.transpose(h_sequence, (1, 0, 2))       # (T, B, D)
    hseq_tm = jnp.pad(hseq_tm, ((0, 0), (0, Bp - B), (0, 0)))
    hseq_flat = hseq_tm.reshape(T * Bp, D)
    data_p = jnp.pad(data, ((0, Bp - B), (0, 0)))

    # Zero-pad the MLP widths to 128 lanes (identity math, see header note).
    w1d = jnp.pad(params["w1d"], ((0, 0), (0, Lp - L)))
    w1h = jnp.pad(params["w1h"], ((0, 0), (0, Lp - L)))
    b1 = jnp.pad(params["b1"], ((0, 0), (0, Lp - L)))
    w2 = jnp.pad(params["w2"], ((0, Lp - L), (0, Lp - L)))
    b2 = jnp.pad(params["b2"], ((0, 0), (0, Lp - L)))

    inputs = (hseq_flat, data_p,
              params["wih"], params["whh"], params["b"],
              w1d, w1h, b1, w2, b2)

    grid_spec = pltpu.PrefetchScalarGridSpec(
        num_scalar_prefetch=0,
        grid=(1,),
        in_specs=[_full_spec(x.shape) for x in inputs],
        out_specs=pl.BlockSpec((Bp, Lp), lambda i: (0, 0)),
    )

    kernel = functools.partial(_lstm_mlp_kernel, T=T, Bp=Bp, D=D)

    out = pl.pallas_call(
        kernel,
        out_shape=jax.ShapeDtypeStruct((Bp, Lp), jnp.float32),
        grid_spec=grid_spec,
        compiler_params=pltpu.CompilerParams(dimension_semantics=("arbitrary",)),
    )(*inputs)
    return out[:B, :L]


# -----------------------------------------------------------------------------
# Deterministic parameter init (synthetic; mirrors PyTorch module shapes).
# Fused gate-major layout along the output dim: columns [i | f | g | o].
# -----------------------------------------------------------------------------
def init_params(key, arch_dim, data_dim, dim_logits):
    ks = jax.random.split(key, 10)
    s_rnn = 1.0 / np.sqrt(arch_dim)
    s_l1 = 1.0 / np.sqrt(arch_dim + data_dim)
    s_l2 = 1.0 / np.sqrt(dim_logits)

    def u(k, shape, s):
        return jax.random.uniform(k, shape, jnp.float32, minval=-s, maxval=s)

    wih = u(ks[0], (arch_dim, 4 * arch_dim), s_rnn)      # (in, 4*out), gates [i|f|g|o]
    whh = u(ks[1], (arch_dim, 4 * arch_dim), s_rnn)
    b = (u(ks[2], (1, 4 * arch_dim), s_rnn)
         + u(ks[3], (1, 4 * arch_dim), s_rnn))           # b_ih + b_hh
    w1d = u(ks[4], (data_dim, dim_logits), s_l1)         # W1 columns for `data`
    w1h = u(ks[5], (arch_dim, dim_logits), s_l1)         # W1 columns for h_last
    b1 = u(ks[6], (1, dim_logits), s_l1)
    w2 = u(ks[7], (dim_logits, dim_logits), s_l2)
    b2 = u(ks[8], (1, dim_logits), s_l2)
    return dict(wih=wih, whh=whh, b=b, w1d=w1d, w1h=w1h, b1=b1, w2=w2, b2=b2)


# -----------------------------------------------------------------------------
# Pure-JAX reference (same math, same param layout) for a correctness check.
# -----------------------------------------------------------------------------
def reference_forward(h_sequence, data, p):
    B, T, D = h_sequence.shape
    h = jnp.zeros((B, D), jnp.float32)
    c = jnp.zeros((B, D), jnp.float32)
    for t in range(T):
        x = h_sequence[:, t, :]
        gates = x @ p["wih"] + h @ p["whh"] + p["b"]
        i = jax.nn.sigmoid(gates[:, 0 * D:1 * D])
        f = jax.nn.sigmoid(gates[:, 1 * D:2 * D])
        g = jnp.tanh(gates[:, 2 * D:3 * D])
        o = jax.nn.sigmoid(gates[:, 3 * D:4 * D])
        c = f * c + i * g
        h = o * jnp.tanh(c)
    z = jnp.maximum(data @ p["w1d"] + h @ p["w1h"] + p["b1"], 0.0)
    return z @ p["w2"] + p["b2"]


if __name__ == "__main__":
    B, T, arch_dim, data_dim, dim_logits = 4, 8, 16, 256, 10

    key = jax.random.PRNGKey(0)
    k_seq, k_data, k_par = jax.random.split(key, 3)
    h_sequence = jax.random.normal(k_seq, (B, T, arch_dim), jnp.float32)
    data = jax.random.normal(k_data, (B, data_dim), jnp.float32)
    params = init_params(k_par, arch_dim, data_dim, dim_logits)

    logits = lstm_approximator_forward(h_sequence, data, params)
    logits = jax.block_until_ready(logits)

    ref = reference_forward(h_sequence, data, params)
    np.testing.assert_allclose(np.asarray(logits), np.asarray(ref),
                               rtol=1e-4, atol=1e-5)

    print("KERNEL_OK")
</pallas_src>

<mosaic_0001>
module attributes {stable_mosaic.version = 11 : i64} {
  func.func @_lstm_mlp_kernel(%arg0: i32, %arg1: memref<64x16xf32, #tpu.memory_space<vmem>>, %arg2: memref<8x256xf32, #tpu.memory_space<vmem>>, %arg3: memref<16x64xf32, #tpu.memory_space<vmem>>, %arg4: memref<16x64xf32, #tpu.memory_space<vmem>>, %arg5: memref<1x64xf32, #tpu.memory_space<vmem>>, %arg6: memref<256x128xf32, #tpu.memory_space<vmem>>, %arg7: memref<16x128xf32, #tpu.memory_space<vmem>>, %arg8: memref<1x128xf32, #tpu.memory_space<vmem>>, %arg9: memref<128x128xf32, #tpu.memory_space<vmem>>, %arg10: memref<1x128xf32, #tpu.memory_space<vmem>>, %arg11: memref<8x128xf32, #tpu.memory_space<vmem>>) attributes {dimension_semantics = [#tpu.dimension_semantics<arbitrary>], iteration_bounds = array<i64: 1>, scalar_prefetch = 0 : i64, scratch_operands = 0 : i64, tpu.core_type = #tpu.core_type<tc>, window_params = [{pipeline_mode = #tpu.pipeline_mode<synchronous>, transform_indices = @transform_0, window_bounds = array<i64: 64, 16>}, {pipeline_mode = #tpu.pipeline_mode<synchronous>, transform_indices = @transform_1, window_bounds = array<i64: 8, 256>}, {pipeline_mode = #tpu.pipeline_mode<synchronous>, transform_indices = @transform_2, window_bounds = array<i64: 16, 64>}, {pipeline_mode = #tpu.pipeline_mode<synchronous>, transform_indices = @transform_3, window_bounds = array<i64: 16, 64>}, {pipeline_mode = #tpu.pipeline_mode<synchronous>, transform_indices = @transform_4, window_bounds = array<i64: 1, 64>}, {pipeline_mode = #tpu.pipeline_mode<synchronous>, transform_indices = @transform_5, window_bounds = array<i64: 256, 128>}, {pipeline_mode = #tpu.pipeline_mode<synchronous>, transform_indices = @transform_6, window_bounds = array<i64: 16, 128>}, {pipeline_mode = #tpu.pipeline_mode<synchronous>, transform_indices = @transform_7, window_bounds = array<i64: 1, 128>}, {pipeline_mode = #tpu.pipeline_mode<synchronous>, transform_indices = @transform_8, window_bounds = array<i64: 128, 128>}, {pipeline_mode = #tpu.pipeline_mode<synchronous>, transform_indices = @transform_9, window_bounds = array<i64: 1, 128>}, {pipeline_mode = #tpu.pipeline_mode<synchronous>, transform_indices = @transform_10, window_bounds = array<i64: 8, 128>}]} {
    %c0 = arith.constant 0 : index
    %c0_0 = arith.constant 0 : index
    %0 = vector.load %arg1[%c0, %c0_0] : memref<64x16xf32, #tpu.memory_space<vmem>>, vector<64x16xf32>
    %c0_1 = arith.constant 0 : index
    %c0_2 = arith.constant 0 : index
    %1 = vector.load %arg3[%c0_1, %c0_2] : memref<16x64xf32, #tpu.memory_space<vmem>>, vector<16x64xf32>
    %cst = arith.constant dense<0.000000e+00> : vector<64x64xf32>
    %2 = tpu.matmul %0, %1, %cst {dimension_numbers = #tpu.dot_dimension_numbers<[1], [0], [0], [1], [0, 0, 1, 1], [], []>} : vector<64x16xf32>, vector<16x64xf32>, vector<64x64xf32> -> vector<64x64xf32>
    %c0_3 = arith.constant 0 : index
    %c0_4 = arith.constant 0 : index
    %3 = vector.load %arg5[%c0_3, %c0_4] : memref<1x64xf32, #tpu.memory_space<vmem>>, vector<1x64xf32>
    %4 = vector.broadcast %3 : vector<1x64xf32> to vector<64x64xf32>
    %5 = arith.addf %2, %4 : vector<64x64xf32>
    %c0_5 = arith.constant 0 : index
    %c0_6 = arith.constant 0 : index
    %6 = vector.load %arg4[%c0_5, %c0_6] : memref<16x64xf32, #tpu.memory_space<vmem>>, vector<16x64xf32>
    %cst_7 = arith.constant 0.000000e+00 : f32
    %7 = vector.broadcast %cst_7 : f32 to vector<8x16xf32>
    %cst_8 = arith.constant 0.000000e+00 : f32
    %8 = vector.broadcast %cst_8 : f32 to vector<8x16xf32>
    %9 = vector.extract_strided_slice %5 {offsets = [0, 0], sizes = [8, 64], strides = [1, 1]} : vector<64x64xf32> to vector<8x64xf32>
    %cst_9 = arith.constant dense<0.000000e+00> : vector<8x64xf32>
    %10 = tpu.matmul %7, %6, %cst_9 {dimension_numbers = #tpu.dot_dimension_numbers<[1], [0], [0], [1], [0, 0, 1, 1], [], []>} : vector<8x16xf32>, vector<16x64xf32>, vector<8x64xf32> -> vector<8x64xf32>
    %11 = arith.addf %9, %10 : vector<8x64xf32>
    %12 = vector.extract_strided_slice %11 {offsets = [0, 0], sizes = [8, 16], strides = [1, 1]} : vector<8x64xf32> to vector<8x16xf32>
    %13 = arith.negf %12 : vector<8x16xf32>
    %14 = math.exp %13 : vector<8x16xf32>
    %cst_10 = arith.constant 1.000000e+00 : f32
    %15 = vector.broadcast %cst_10 : f32 to vector<8x16xf32>
    %16 = arith.addf %15, %14 : vector<8x16xf32>
    %17 = arith.divf %15, %16 : vector<8x16xf32>
    %18 = vector.extract_strided_slice %11 {offsets = [0, 16], sizes = [8, 16], strides = [1, 1]} : vector<8x64xf32> to vector<8x16xf32>
    %19 = arith.negf %18 : vector<8x16xf32>
    %20 = math.exp %19 : vector<8x16xf32>
    %cst_11 = arith.constant 1.000000e+00 : f32
    %21 = vector.broadcast %cst_11 : f32 to vector<8x16xf32>
    %22 = arith.addf %21, %20 : vector<8x16xf32>
    %23 = arith.divf %21, %22 : vector<8x16xf32>
    %24 = vector.extract_strided_slice %11 {offsets = [0, 32], sizes = [8, 16], strides = [1, 1]} : vector<8x64xf32> to vector<8x16xf32>
    %25 = math.tanh %24 : vector<8x16xf32>
    %26 = vector.extract_strided_slice %11 {offsets = [0, 48], sizes = [8, 16], strides = [1, 1]} : vector<8x64xf32> to vector<8x16xf32>
    %27 = arith.negf %26 : vector<8x16xf32>
    %28 = math.exp %27 : vector<8x16xf32>
    %cst_12 = arith.constant 1.000000e+00 : f32
    %29 = vector.broadcast %cst_12 : f32 to vector<8x16xf32>
    %30 = arith.addf %29, %28 : vector<8x16xf32>
    %31 = arith.divf %29, %30 : vector<8x16xf32>
    %32 = arith.mulf %23, %8 : vector<8x16xf32>
    %33 = arith.mulf %17, %25 : vector<8x16xf32>
    %34 = arith.addf %32, %33 : vector<8x16xf32>
    %35 = math.tanh %34 : vector<8x16xf32>
    %36 = arith.mulf %31, %35 : vector<8x16xf32>
    %37 = vector.extract_strided_slice %5 {offsets = [8, 0], sizes = [8, 64], strides = [1, 1]} : vector<64x64xf32> to vector<8x64xf32>
    %cst_13 = arith.constant dense<0.000000e+00> : vector<8x64xf32>
    %38 = tpu.matmul %36, %6, %cst_13 {dimension_numbers = #tpu.dot_dimension_numbers<[1], [0], [0], [1], [0, 0, 1, 1], [], []>} : vector<8x16xf32>, vector<16x64xf32>, vector<8x64xf32> -> vector<8x64xf32>
    %39 = arith.addf %37, %38 : vector<8x64xf32>
    %40 = vector.extract_strided_slice %39 {offsets = [0, 0], sizes = [8, 16], strides = [1, 1]} : vector<8x64xf32> to vector<8x16xf32>
    %41 = arith.negf %40 : vector<8x16xf32>
    %42 = math.exp %41 : vector<8x16xf32>
    %cst_14 = arith.constant 1.000000e+00 : f32
    %43 = vector.broadcast %cst_14 : f32 to vector<8x16xf32>
    %44 = arith.addf %43, %42 : vector<8x16xf32>
    %45 = arith.divf %43, %44 : vector<8x16xf32>
    %46 = vector.extract_strided_slice %39 {offsets = [0, 16], sizes = [8, 16], strides = [1, 1]} : vector<8x64xf32> to vector<8x16xf32>
    %47 = arith.negf %46 : vector<8x16xf32>
    %48 = math.exp %47 : vector<8x16xf32>
    %cst_15 = arith.constant 1.000000e+00 : f32
    %49 = vector.broadcast %cst_15 : f32 to vector<8x16xf32>
    %50 = arith.addf %49, %48 : vector<8x16xf32>
    %51 = arith.divf %49, %50 : vector<8x16xf32>
    %52 = vector.extract_strided_slice %39 {offsets = [0, 32], sizes = [8, 16], strides = [1, 1]} : vector<8x64xf32> to vector<8x16xf32>
    %53 = math.tanh %52 : vector<8x16xf32>
    %54 = vector.extract_strided_slice %39 {offsets = [0, 48], sizes = [8, 16], strides = [1, 1]} : vector<8x64xf32> to vector<8x16xf32>
    %55 = arith.negf %54 : vector<8x16xf32>
    %56 = math.exp %55 : vector<8x16xf32>
    %cst_16 = arith.constant 1.000000e+00 : f32
    %57 = vector.broadcast %cst_16 : f32 to vector<8x16xf32>
    %58 = arith.addf %57, %56 : vector<8x16xf32>
    %59 = arith.divf %57, %58 : vector<8x16xf32>
    %60 = arith.mulf %51, %34 : vector<8x16xf32>
    %61 = arith.mulf %45, %53 : vector<8x16xf32>
    %62 = arith.addf %60, %61 : vector<8x16xf32>
    %63 = math.tanh %62 : vector<8x16xf32>
    %64 = arith.mulf %59, %63 : vector<8x16xf32>
    %65 = vector.extract_strided_slice %5 {offsets = [16, 0], sizes = [8, 64], strides = [1, 1]} : vector<64x64xf32> to vector<8x64xf32>
    %cst_17 = arith.constant dense<0.000000e+00> : vector<8x64xf32>
    %66 = tpu.matmul %64, %6, %cst_17 {dimension_numbers = #tpu.dot_dimension_numbers<[1], [0], [0], [1], [0, 0, 1, 1], [], []>} : vector<8x16xf32>, vector<16x64xf32>, vector<8x64xf32> -> vector<8x64xf32>
    %67 = arith.addf %65, %66 : vector<8x64xf32>
    %68 = vector.extract_strided_slice %67 {offsets = [0, 0], sizes = [8, 16], strides = [1, 1]} : vector<8x64xf32> to vector<8x16xf32>
    %69 = arith.negf %68 : vector<8x16xf32>
    %70 = math.exp %69 : vector<8x16xf32>
    %cst_18 = arith.constant 1.000000e+00 : f32
    %71 = vector.broadcast %cst_18 : f32 to vector<8x16xf32>
    %72 = arith.addf %71, %70 : vector<8x16xf32>
    %73 = arith.divf %71, %72 : vector<8x16xf32>
    %74 = vector.extract_strided_slice %67 {offsets = [0, 16], sizes = [8, 16], strides = [1, 1]} : vector<8x64xf32> to vector<8x16xf32>
    %75 = arith.negf %74 : vector<8x16xf32>
    %76 = math.exp %75 : vector<8x16xf32>
    %cst_19 = arith.constant 1.000000e+00 : f32
    %77 = vector.broadcast %cst_19 : f32 to vector<8x16xf32>
    %78 = arith.addf %77, %76 : vector<8x16xf32>
    %79 = arith.divf %77, %78 : vector<8x16xf32>
    %80 = vector.extract_strided_slice %67 {offsets = [0, 32], sizes = [8, 16], strides = [1, 1]} : vector<8x64xf32> to vector<8x16xf32>
    %81 = math.tanh %80 : vector<8x16xf32>
    %82 = vector.extract_strided_slice %67 {offsets = [0, 48], sizes = [8, 16], strides = [1, 1]} : vector<8x64xf32> to vector<8x16xf32>
    %83 = arith.negf %82 : vector<8x16xf32>
    %84 = math.exp %83 : vector<8x16xf32>
    %cst_20 = arith.constant 1.000000e+00 : f32
    %85 = vector.broadcast %cst_20 : f32 to vector<8x16xf32>
    %86 = arith.addf %85, %84 : vector<8x16xf32>
    %87 = arith.divf %85, %86 : vector<8x16xf32>
    %88 = arith.mulf %79, %62 : vector<8x16xf32>
    %89 = arith.mulf %73, %81 : vector<8x16xf32>
    %90 = arith.addf %88, %89 : vector<8x16xf32>
    %91 = math.tanh %90 : vector<8x16xf32>
    %92 = arith.mulf %87, %91 : vector<8x16xf32>
    %93 = vector.extract_strided_slice %5 {offsets = [24, 0], sizes = [8, 64], strides = [1, 1]} : vector<64x64xf32> to vector<8x64xf32>
    %cst_21 = arith.constant dense<0.000000e+00> : vector<8x64xf32>
    %94 = tpu.matmul %92, %6, %cst_21 {dimension_numbers = #tpu.dot_dimension_numbers<[1], [0], [0], [1], [0, 0, 1, 1], [], []>} : vector<8x16xf32>, vector<16x64xf32>, vector<8x64xf32> -> vector<8x64xf32>
    %95 = arith.addf %93, %94 : vector<8x64xf32>
    %96 = vector.extract_strided_slice %95 {offsets = [0, 0], sizes = [8, 16], strides = [1, 1]} : vector<8x64xf32> to vector<8x16xf32>
    %97 = arith.negf %96 : vector<8x16xf32>
    %98 = math.exp %97 : vector<8x16xf32>
    %cst_22 = arith.constant 1.000000e+00 : f32
    %99 = vector.broadcast %cst_22 : f32 to vector<8x16xf32>
    %100 = arith.addf %99, %98 : vector<8x16xf32>
    %101 = arith.divf %99, %100 : vector<8x16xf32>
    %102 = vector.extract_strided_slice %95 {offsets = [0, 16], sizes = [8, 16], strides = [1, 1]} : vector<8x64xf32> to vector<8x16xf32>
    %103 = arith.negf %102 : vector<8x16xf32>
    %104 = math.exp %103 : vector<8x16xf32>
    %cst_23 = arith.constant 1.000000e+00 : f32
    %105 = vector.broadcast %cst_23 : f32 to vector<8x16xf32>
    %106 = arith.addf %105, %104 : vector<8x16xf32>
    %107 = arith.divf %105, %106 : vector<8x16xf32>
    %108 = vector.extract_strided_slice %95 {offsets = [0, 32], sizes = [8, 16], strides = [1, 1]} : vector<8x64xf32> to vector<8x16xf32>
    %109 = math.tanh %108 : vector<8x16xf32>
    %110 = vector.extract_strided_slice %95 {offsets = [0, 48], sizes = [8, 16], strides = [1, 1]} : vector<8x64xf32> to vector<8x16xf32>
    %111 = arith.negf %110 : vector<8x16xf32>
    %112 = math.exp %111 : vector<8x16xf32>
    %cst_24 = arith.constant 1.000000e+00 : f32
    %113 = vector.broadcast %cst_24 : f32 to vector<8x16xf32>
    %114 = arith.addf %113, %112 : vector<8x16xf32>
    %115 = arith.divf %113, %114 : vector<8x16xf32>
    %116 = arith.mulf %107, %90 : vector<8x16xf32>
    %117 = arith.mulf %101, %109 : vector<8x16xf32>
    %118 = arith.addf %116, %117 : vector<8x16xf32>
    %119 = math.tanh %118 : vector<8x16xf32>
    %120 = arith.mulf %115, %119 : vector<8x16xf32>
    %121 = vector.extract_strided_slice %5 {offsets = [32, 0], sizes = [8, 64], strides = [1, 1]} : vector<64x64xf32> to vector<8x64xf32>
    %cst_25 = arith.constant dense<0.000000e+00> : vector<8x64xf32>
    %122 = tpu.matmul %120, %6, %cst_25 {dimension_numbers = #tpu.dot_dimension_numbers<[1], [0], [0], [1], [0, 0, 1, 1], [], []>} : vector<8x16xf32>, vector<16x64xf32>, vector<8x64xf32> -> vector<8x64xf32>
    %123 = arith.addf %121, %122 : vector<8x64xf32>
    %124 = vector.extract_strided_slice %123 {offsets = [0, 0], sizes = [8, 16], strides = [1, 1]} : vector<8x64xf32> to vector<8x16xf32>
    %125 = arith.negf %124 : vector<8x16xf32>
    %126 = math.exp %125 : vector<8x16xf32>
    %cst_26 = arith.constant 1.000000e+00 : f32
    %127 = vector.broadcast %cst_26 : f32 to vector<8x16xf32>
    %128 = arith.addf %127, %126 : vector<8x16xf32>
    %129 = arith.divf %127, %128 : vector<8x16xf32>
    %130 = vector.extract_strided_slice %123 {offsets = [0, 16], sizes = [8, 16], strides = [1, 1]} : vector<8x64xf32> to vector<8x16xf32>
    %131 = arith.negf %130 : vector<8x16xf32>
    %132 = math.exp %131 : vector<8x16xf32>
    %cst_27 = arith.constant 1.000000e+00 : f32
    %133 = vector.broadcast %cst_27 : f32 to vector<8x16xf32>
    %134 = arith.addf %133, %132 : vector<8x16xf32>
    %135 = arith.divf %133, %134 : vector<8x16xf32>
    %136 = vector.extract_strided_slice %123 {offsets = [0, 32], sizes = [8, 16], strides = [1, 1]} : vector<8x64xf32> to vector<8x16xf32>
    %137 = math.tanh %136 : vector<8x16xf32>
    %138 = vector.extract_strided_slice %123 {offsets = [0, 48], sizes = [8, 16], strides = [1, 1]} : vector<8x64xf32> to vector<8x16xf32>
    %139 = arith.negf %138 : vector<8x16xf32>
    %140 = math.exp %139 : vector<8x16xf32>
    %cst_28 = arith.constant 1.000000e+00 : f32
    %141 = vector.broadcast %cst_28 : f32 to vector<8x16xf32>
    %142 = arith.addf %141, %140 : vector<8x16xf32>
    %143 = arith.divf %141, %142 : vector<8x16xf32>
    %144 = arith.mulf %135, %118 : vector<8x16xf32>
    %145 = arith.mulf %129, %137 : vector<8x16xf32>
    %146 = arith.addf %144, %145 : vector<8x16xf32>
    %147 = math.tanh %146 : vector<8x16xf32>
    %148 = arith.mulf %143, %147 : vector<8x16xf32>
    %149 = vector.extract_strided_slice %5 {offsets = [40, 0], sizes = [8, 64], strides = [1, 1]} : vector<64x64xf32> to vector<8x64xf32>
    %cst_29 = arith.constant dense<0.000000e+00> : vector<8x64xf32>
    %150 = tpu.matmul %148, %6, %cst_29 {dimension_numbers = #tpu.dot_dimension_numbers<[1], [0], [0], [1], [0, 0, 1, 1], [], []>} : vector<8x16xf32>, vector<16x64xf32>, vector<8x64xf32> -> vector<8x64xf32>
    %151 = arith.addf %149, %150 : vector<8x64xf32>
    %152 = vector.extract_strided_slice %151 {offsets = [0, 0], sizes = [8, 16], strides = [1, 1]} : vector<8x64xf32> to vector<8x16xf32>
    %153 = arith.negf %152 : vector<8x16xf32>
    %154 = math.exp %153 : vector<8x16xf32>
    %cst_30 = arith.constant 1.000000e+00 : f32
    %155 = vector.broadcast %cst_30 : f32 to vector<8x16xf32>
    %156 = arith.addf %155, %154 : vector<8x16xf32>
    %157 = arith.divf %155, %156 : vector<8x16xf32>
    %158 = vector.extract_strided_slice %151 {offsets = [0, 16], sizes = [8, 16], strides = [1, 1]} : vector<8x64xf32> to vector<8x16xf32>
    %159 = arith.negf %158 : vector<8x16xf32>
    %160 = math.exp %159 : vector<8x16xf32>
    %cst_31 = arith.constant 1.000000e+00 : f32
    %161 = vector.broadcast %cst_31 : f32 to vector<8x16xf32>
    %162 = arith.addf %161, %160 : vector<8x16xf32>
    %163 = arith.divf %161, %162 : vector<8x16xf32>
    %164 = vector.extract_strided_slice %151 {offsets = [0, 32], sizes = [8, 16], strides = [1, 1]} : vector<8x64xf32> to vector<8x16xf32>
    %165 = math.tanh %164 : vector<8x16xf32>
    %166 = vector.extract_strided_slice %151 {offsets = [0, 48], sizes = [8, 16], strides = [1, 1]} : vector<8x64xf32> to vector<8x16xf32>
    %167 = arith.negf %166 : vector<8x16xf32>
    %168 = math.exp %167 : vector<8x16xf32>
    %cst_32 = arith.constant 1.000000e+00 : f32
    %169 = vector.broadcast %cst_32 : f32 to vector<8x16xf32>
    %170 = arith.addf %169, %168 : vector<8x16xf32>
    %171 = arith.divf %169, %170 : vector<8x16xf32>
    %172 = arith.mulf %163, %146 : vector<8x16xf32>
    %173 = arith.mulf %157, %165 : vector<8x16xf32>
    %174 = arith.addf %172, %173 : vector<8x16xf32>
    %175 = math.tanh %174 : vector<8x16xf32>
    %176 = arith.mulf %171, %175 : vector<8x16xf32>
    %177 = vector.extract_strided_slice %5 {offsets = [48, 0], sizes = [8, 64], strides = [1, 1]} : vector<64x64xf32> to vector<8x64xf32>
    %cst_33 = arith.constant dense<0.000000e+00> : vector<8x64xf32>
    %178 = tpu.matmul %176, %6, %cst_33 {dimension_numbers = #tpu.dot_dimension_numbers<[1], [0], [0], [1], [0, 0, 1, 1], [], []>} : vector<8x16xf32>, vector<16x64xf32>, vector<8x64xf32> -> vector<8x64xf32>
    %179 = arith.addf %177, %178 : vector<8x64xf32>
    %180 = vector.extract_strided_slice %179 {offsets = [0, 0], sizes = [8, 16], strides = [1, 1]} : vector<8x64xf32> to vector<8x16xf32>
    %181 = arith.negf %180 : vector<8x16xf32>
    %182 = math.exp %181 : vector<8x16xf32>
    %cst_34 = arith.constant 1.000000e+00 : f32
    %183 = vector.broadcast %cst_34 : f32 to vector<8x16xf32>
    %184 = arith.addf %183, %182 : vector<8x16xf32>
    %185 = arith.divf %183, %184 : vector<8x16xf32>
    %186 = vector.extract_strided_slice %179 {offsets = [0, 16], sizes = [8, 16], strides = [1, 1]} : vector<8x64xf32> to vector<8x16xf32>
    %187 = arith.negf %186 : vector<8x16xf32>
    %188 = math.exp %187 : vector<8x16xf32>
    %cst_35 = arith.constant 1.000000e+00 : f32
    %189 = vector.broadcast %cst_35 : f32 to vector<8x16xf32>
    %190 = arith.addf %189, %188 : vector<8x16xf32>
    %191 = arith.divf %189, %190 : vector<8x16xf32>
    %192 = vector.extract_strided_slice %179 {offsets = [0, 32], sizes = [8, 16], strides = [1, 1]} : vector<8x64xf32> to vector<8x16xf32>
    %193 = math.tanh %192 : vector<8x16xf32>
    %194 = vector.extract_strided_slice %179 {offsets = [0, 48], sizes = [8, 16], strides = [1, 1]} : vector<8x64xf32> to vector<8x16xf32>
    %195 = arith.negf %194 : vector<8x16xf32>
    %196 = math.exp %195 : vector<8x16xf32>
    %cst_36 = arith.constant 1.000000e+00 : f32
    %197 = vector.broadcast %cst_36 : f32 to vector<8x16xf32>
    %198 = arith.addf %197, %196 : vector<8x16xf32>
    %199 = arith.divf %197, %198 : vector<8x16xf32>
    %200 = arith.mulf %191, %174 : vector<8x16xf32>
    %201 = arith.mulf %185, %193 : vector<8x16xf32>
    %202 = arith.addf %200, %201 : vector<8x16xf32>
    %203 = math.tanh %202 : vector<8x16xf32>
    %204 = arith.mulf %199, %203 : vector<8x16xf32>
    %205 = vector.extract_strided_slice %5 {offsets = [56, 0], sizes = [8, 64], strides = [1, 1]} : vector<64x64xf32> to vector<8x64xf32>
    %cst_37 = arith.constant dense<0.000000e+00> : vector<8x64xf32>
    %206 = tpu.matmul %204, %6, %cst_37 {dimension_numbers = #tpu.dot_dimension_numbers<[1], [0], [0], [1], [0, 0, 1, 1], [], []>} : vector<8x16xf32>, vector<16x64xf32>, vector<8x64xf32> -> vector<8x64xf32>
    %207 = arith.addf %205, %206 : vector<8x64xf32>
    %208 = vector.extract_strided_slice %207 {offsets = [0, 0], sizes = [8, 16], strides = [1, 1]} : vector<8x64xf32> to vector<8x16xf32>
    %209 = arith.negf %208 : vector<8x16xf32>
    %210 = math.exp %209 : vector<8x16xf32>
    %cst_38 = arith.constant 1.000000e+00 : f32
    %211 = vector.broadcast %cst_38 : f32 to vector<8x16xf32>
    %212 = arith.addf %211, %210 : vector<8x16xf32>
    %213 = arith.divf %211, %212 : vector<8x16xf32>
    %214 = vector.extract_strided_slice %207 {offsets = [0, 16], sizes = [8, 16], strides = [1, 1]} : vector<8x64xf32> to vector<8x16xf32>
    %215 = arith.negf %214 : vector<8x16xf32>
    %216 = math.exp %215 : vector<8x16xf32>
    %cst_39 = arith.constant 1.000000e+00 : f32
    %217 = vector.broadcast %cst_39 : f32 to vector<8x16xf32>
    %218 = arith.addf %217, %216 : vector<8x16xf32>
    %219 = arith.divf %217, %218 : vector<8x16xf32>
    %220 = vector.extract_strided_slice %207 {offsets = [0, 32], sizes = [8, 16], strides = [1, 1]} : vector<8x64xf32> to vector<8x16xf32>
    %221 = math.tanh %220 : vector<8x16xf32>
    %222 = vector.extract_strided_slice %207 {offsets = [0, 48], sizes = [8, 16], strides = [1, 1]} : vector<8x64xf32> to vector<8x16xf32>
    %223 = arith.negf %222 : vector<8x16xf32>
    %224 = math.exp %223 : vector<8x16xf32>
    %cst_40 = arith.constant 1.000000e+00 : f32
    %225 = vector.broadcast %cst_40 : f32 to vector<8x16xf32>
    %226 = arith.addf %225, %224 : vector<8x16xf32>
    %227 = arith.divf %225, %226 : vector<8x16xf32>
    %228 = arith.mulf %219, %202 : vector<8x16xf32>
    %229 = arith.mulf %213, %221 : vector<8x16xf32>
    %230 = arith.addf %228, %229 : vector<8x16xf32>
    %231 = math.tanh %230 : vector<8x16xf32>
    %232 = arith.mulf %227, %231 : vector<8x16xf32>
    %c0_41 = arith.constant 0 : index
    %c0_42 = arith.constant 0 : index
    %233 = vector.load %arg2[%c0_41, %c0_42] : memref<8x256xf32, #tpu.memory_space<vmem>>, vector<8x256xf32>
    %c0_43 = arith.constant 0 : index
    %c0_44 = arith.constant 0 : index
    %234 = vector.load %arg6[%c0_43, %c0_44] : memref<256x128xf32, #tpu.memory_space<vmem>>, vector<256x128xf32>
    %cst_45 = arith.constant dense<0.000000e+00> : vector<8x128xf32>
    %235 = tpu.matmul %233, %234, %cst_45 {dimension_numbers = #tpu.dot_dimension_numbers<[1], [0], [0], [1], [0, 0, 1, 1], [], []>} : vector<8x256xf32>, vector<256x128xf32>, vector<8x128xf32> -> vector<8x128xf32>
    %c0_46 = arith.constant 0 : index
    %c0_47 = arith.constant 0 : index
    %236 = vector.load %arg7[%c0_46, %c0_47] : memref<16x128xf32, #tpu.memory_space<vmem>>, vector<16x128xf32>
    %cst_48 = arith.constant dense<0.000000e+00> : vector<8x128xf32>
    %237 = tpu.matmul %232, %236, %cst_48 {dimension_numbers = #tpu.dot_dimension_numbers<[1], [0], [0], [1], [0, 0, 1, 1], [], []>} : vector<8x16xf32>, vector<16x128xf32>, vector<8x128xf32> -> vector<8x128xf32>
    %238 = arith.addf %235, %237 : vector<8x128xf32>
    %c0_49 = arith.constant 0 : index
    %c0_50 = arith.constant 0 : index
    %239 = vector.load %arg8[%c0_49, %c0_50] : memref<1x128xf32, #tpu.memory_space<vmem>>, vector<1x128xf32>
    %240 = vector.broadcast %239 : vector<1x128xf32> to vector<8x128xf32>
    %241 = arith.addf %238, %240 : vector<8x128xf32>
    %cst_51 = arith.constant 0.000000e+00 : f32
    %242 = vector.broadcast %cst_51 : f32 to vector<8x128xf32>
    %243 = arith.maximumf %241, %242 : vector<8x128xf32>
    %c0_52 = arith.constant 0 : index
    %c0_53 = arith.constant 0 : index
    %244 = vector.load %arg9[%c0_52, %c0_53] : memref<128x128xf32, #tpu.memory_space<vmem>>, vector<128x128xf32>
    %cst_54 = arith.constant dense<0.000000e+00> : vector<8x128xf32>
    %245 = tpu.matmul %243, %244, %cst_54 {dimension_numbers = #tpu.dot_dimension_numbers<[1], [0], [0], [1], [0, 0, 1, 1], [], []>} : vector<8x128xf32>, vector<128x128xf32>, vector<8x128xf32> -> vector<8x128xf32>
    %c0_55 = arith.constant 0 : index
    %c0_56 = arith.constant 0 : index
    %246 = vector.load %arg10[%c0_55, %c0_56] : memref<1x128xf32, #tpu.memory_space<vmem>>, vector<1x128xf32>
    %247 = vector.broadcast %246 : vector<1x128xf32> to vector<8x128xf32>
    %248 = arith.addf %245, %247 : vector<8x128xf32>
    %c0_57 = arith.constant 0 : index
    %c0_58 = arith.constant 0 : index
    %249 = vector.load %arg11[%c0_57, %c0_58] : memref<8x128xf32, #tpu.memory_space<vmem>>, vector<8x128xf32>
    tpu.vector_store %arg11[%c0_57, %c0_58], %248 {strides = array<i32>} : memref<8x128xf32, #tpu.memory_space<vmem>>, vector<8x128xf32>,
    return
  }
  func.func @transform_0(%arg0: i32) -> (i32, i32) {
    %c0_i32 = arith.constant 0 : i32
    %c0_i32_0 = arith.constant 0 : i32
    %c0_i32_1 = arith.constant 0 : i32
    return %c0_i32, %c0_i32_0 : i32, i32
  }
  func.func @transform_1(%arg0: i32) -> (i32, i32) {
    %c0_i32 = arith.constant 0 : i32
    %c0_i32_0 = arith.constant 0 : i32
    %c0_i32_1 = arith.constant 0 : i32
    return %c0_i32, %c0_i32_0 : i32, i32
  }
  func.func @transform_2(%arg0: i32) -> (i32, i32) {
    %c0_i32 = arith.constant 0 : i32
    %c0_i32_0 = arith.constant 0 : i32
    %c0_i32_1 = arith.constant 0 : i32
    return %c0_i32, %c0_i32_0 : i32, i32
  }
  func.func @transform_3(%arg0: i32) -> (i32, i32) {
    %c0_i32 = arith.constant 0 : i32
    %c0_i32_0 = arith.constant 0 : i32
    %c0_i32_1 = arith.constant 0 : i32
    return %c0_i32, %c0_i32_0 : i32, i32
  }
  func.func @transform_4(%arg0: i32) -> (i32, i32) {
    %c0_i32 = arith.constant 0 : i32
    %c0_i32_0 = arith.constant 0 : i32
    %c0_i32_1 = arith.constant 0 : i32
    return %c0_i32, %c0_i32_0 : i32, i32
  }
  func.func @transform_5(%arg0: i32) -> (i32, i32) {
    %c0_i32 = arith.constant 0 : i32
    %c0_i32_0 = arith.constant 0 : i32
    %c0_i32_1 = arith.constant 0 : i32
    return %c0_i32, %c0_i32_0 : i32, i32
  }
  func.func @transform_6(%arg0: i32) -> (i32, i32) {
    %c0_i32 = arith.constant 0 : i32
    %c0_i32_0 = arith.constant 0 : i32
    %c0_i32_1 = arith.constant 0 : i32
    return %c0_i32, %c0_i32_0 : i32, i32
  }
  func.func @transform_7(%arg0: i32) -> (i32, i32) {
    %c0_i32 = arith.constant 0 : i32
    %c0_i32_0 = arith.constant 0 : i32
    %c0_i32_1 = arith.constant 0 : i32
    return %c0_i32, %c0_i32_0 : i32, i32
  }
  func.func @transform_8(%arg0: i32) -> (i32, i32) {
    %c0_i32 = arith.constant 0 : i32
    %c0_i32_0 = arith.constant 0 : i32
    %c0_i32_1 = arith.constant 0 : i32
    return %c0_i32, %c0_i32_0 : i32, i32
  }
  func.func @transform_9(%arg0: i32) -> (i32, i32) {
    %c0_i32 = arith.constant 0 : i32
    %c0_i32_0 = arith.constant 0 : i32
    %c0_i32_1 = arith.constant 0 : i32
    return %c0_i32, %c0_i32_0 : i32, i32
  }
  func.func @transform_10(%arg0: i32) -> (i32, i32) {
    %c0_i32 = arith.constant 0 : i32
    %c0_i32_0 = arith.constant 0 : i32
    %c0_i32_1 = arith.constant 0 : i32
    return %c0_i32, %c0_i32_0 : i32, i32
  }
}

</mosaic_0001>

<llo_original>
// kernel: tpu_custom_call.1
$region0: #{tpu_custom_call.1}
  #allocation0 [shape = 'u32[]', space=smem, size = 0x4, offset = 0x4, fixed_abs, tag = 'smem constant byte address 0x4 - core index']
  #allocation1 [shape = 'u32[144,128]{1,0:T(1,128)}', space=vmem, size = 0x12000, scoped, tag = 'internal scratch']
  %s0 = inlined_call_operand.vmem [shape: f32[64,16], index: 0, kind: input, shape index: {}]
  %s1 = inlined_call_operand.vmem [shape: f32[8,256], index: 1, kind: input, shape index: {}]
  %s2 = inlined_call_operand.vmem [shape: f32[16,64], index: 2, kind: input, shape index: {}]
  %s3 = inlined_call_operand.vmem [shape: f32[16,64], index: 3, kind: input, shape index: {}]
  %s4 = inlined_call_operand.vmem [shape: f32[1,64], index: 4, kind: input, shape index: {}]
  %s5 = inlined_call_operand.hbm [shape: f32[256,128], index: 5, kind: input, shape index: {}]
  %s6 = inlined_call_operand.vmem [shape: f32[16,128], index: 6, kind: input, shape index: {}]
  %s7 = inlined_call_operand.vmem [shape: f32[1,128], index: 7, kind: input, shape index: {}]
  %s8 = inlined_call_operand.hbm [shape: f32[128,128], index: 8, kind: input, shape index: {}]
  %s9 = inlined_call_operand.vmem [shape: f32[1,128], index: 9, kind: input, shape index: {}]
  %s10 = inlined_call_operand.hbm [shape: f32[8,128], index: 10, kind: output, shape index: {}]
  %s11 = sld [smem:[#allocation0]]
  $region58: #{tpu_custom_call.1} parent=0
    _
  %s13 = ssub.s32 1, %s11
  %s14 = scalar_select 0, %s13, %s11
  $region1: #{tpu_custom_call.1} parent=0
    #allocation2 [shape = 'u8[131072]{0}', space=vmem, size = 0x20000, scoped, tag = 'input window, operand 5, single buffered']
    #allocation3 [shape = 's32[1]{0}', space=sflag, size = 0x4, scoped, tag = 'scoped memory for tpu_custom_call.1']
    #allocation4 [shape = 's32[1]{0}', space=sflag, size = 0x4, scoped, tag = 'scoped memory for tpu_custom_call.1']
    #allocation5 [shape = 'u8[65536]{0}', space=vmem, size = 0x10000, scoped, tag = 'input window, operand 8, single buffered']
    #allocation6 [shape = 's32[1]{0}', space=sflag, size = 0x4, scoped, tag = 'scoped memory for tpu_custom_call.1']
    #allocation7 [shape = 'u8[4096]{0}', space=vmem, size = 0x1000, scoped, tag = 'output window, operand 0, single buffered']
    %15 = vsyncpa [#allocation3], 0
    %16 = vsyncpa [#allocation6], 0
    %17 = vsyncpa [#allocation4], 0
    // Predicated region
    $region2: #{tpu_custom_call.1} parent=1 // pred_check
      _
    $region3: #{tpu_custom_call.1} parent=1 // pred_check_branch
      %19 = sbr.rel (0) target = $region5
    $region4: #{tpu_custom_call.1} parent=1 // pred_region
      _
    $region5: #{tpu_custom_call.1} parent=1 // pred_fallthru
      _
    // Predicated region
    $region6: #{tpu_custom_call.1} parent=1 // pred_check
      _
    $region7: #{tpu_custom_call.1} parent=1 // pred_check_branch
      %21 = sbr.rel (0) target = $region9
    $region8: #{tpu_custom_call.1} parent=1 // pred_region
      _
    $region9: #{tpu_custom_call.1} parent=1 // pred_fallthru
      _
    // Predicated region
    $region10: #{tpu_custom_call.1} parent=1 // pred_check
      _
    $region11: #{tpu_custom_call.1} parent=1 // pred_check_branch
      %23 = sbr.rel (0) target = $region13
    $region12: #{tpu_custom_call.1} parent=1 // pred_region
      _
    $region13: #{tpu_custom_call.1} parent=1 // pred_fallthru
      _
    // Predicated region
    $region14: #{tpu_custom_call.1} parent=1 // pred_check
      _
    $region15: #{tpu_custom_call.1} parent=1 // pred_check_branch
      %25 = sbr.rel (0) target = $region17
    $region16: #{tpu_custom_call.1} parent=1 // pred_region
      _
    $region17: #{tpu_custom_call.1} parent=1 // pred_fallthru
      _
    // Predicated region
    $region18: #{tpu_custom_call.1} parent=1 // pred_check
      _
    $region19: #{tpu_custom_call.1} parent=1 // pred_check_branch
      %27 = sbr.rel (0) target = $region21
    $region20: #{tpu_custom_call.1} parent=1 // pred_region
      _
    $region21: #{tpu_custom_call.1} parent=1 // pred_fallthru
      _
    // Predicated region
    $region22: #{tpu_custom_call.1} parent=1 // pred_check
      _
    $region23: #{tpu_custom_call.1} parent=1 // pred_check_branch
      %29 = sbr.rel (0) target = $region25
    $region24: #{tpu_custom_call.1} parent=1 // pred_region
      %s31 = ssub.s32 4096, 4096
      %32 = vsyncadd [#allocation3], %s31
      %s33 = sshll.u32 [#allocation2], 4
      %s34 = int_to_ptr.vmem [resolvable:$true] %s33
      %39 = dma.hbm_to_vmem [thread:$0]  %s5, 4096, %s34, [#allocation3], 128, 128, 8
    $region25: #{tpu_custom_call.1} parent=1 // pred_fallthru
      _
    // Predicated region
    $region26: #{tpu_custom_call.1} parent=1 // pred_check
      _
    $region27: #{tpu_custom_call.1} parent=1 // pred_check_branch
      %41 = sbr.rel (0) target = $region29
    $region28: #{tpu_custom_call.1} parent=1 // pred_region
      _
    $region29: #{tpu_custom_call.1} parent=1 // pred_fallthru
      _
    // Predicated region
    $region30: #{tpu_custom_call.1} parent=1 // pred_check
      _
    $region31: #{tpu_custom_call.1} parent=1 // pred_check_branch
      %43 = sbr.rel (0) target = $region33
    $region32: #{tpu_custom_call.1} parent=1 // pred_region
      _
    $region33: #{tpu_custom_call.1} parent=1 // pred_fallthru
      _
    // Predicated region
    $region34: #{tpu_custom_call.1} parent=1 // pred_check
      _
    $region35: #{tpu_custom_call.1} parent=1 // pred_check_branch
      %45 = sbr.rel (0) target = $region37
    $region36: #{tpu_custom_call.1} parent=1 // pred_region
      %s47 = ssub.s32 2048, 2048
      %48 = vsyncadd [#allocation6], %s47
      %s49 = sshll.u32 [#allocation5], 4
      %s50 = int_to_ptr.vmem [resolvable:$true] %s49
      %55 = dma.hbm_to_vmem [thread:$0]  %s8, 2048, %s50, [#allocation6], 128, 128, 8
    $region37: #{tpu_custom_call.1} parent=1 // pred_fallthru
      _
    // Predicated region
    $region38: #{tpu_custom_call.1} parent=1 // pred_check
      _
    $region39: #{tpu_custom_call.1} parent=1 // pred_check_branch
      %57 = sbr.rel (0) target = $region41
    $region40: #{tpu_custom_call.1} parent=1 // pred_region
      _
    $region41: #{tpu_custom_call.1} parent=1 // pred_fallthru
      _
    // Predicated region
    $region42: #{tpu_custom_call.1} parent=1 // pred_check
      _
    $region43: #{tpu_custom_call.1} parent=1 // pred_check_branch
      %59 = sbr.rel (0) target = $region45
    $region44: #{tpu_custom_call.1} parent=1 // pred_region
      %60 = dma.done [#allocation3], 4096
    $region45: #{tpu_custom_call.1} parent=1 // pred_fallthru
      _
    // Predicated region
    $region46: #{tpu_custom_call.1} parent=1 // pred_check
      _
    $region47: #{tpu_custom_call.1} parent=1 // pred_check_branch
      %62 = sbr.rel (0) target = $region49
    $region48: #{tpu_custom_call.1} parent=1 // pred_region
      %63 = dma.done [#allocation6], 2048
    $region49: #{tpu_custom_call.1} parent=1 // pred_fallthru
      _
    %v64 = vld [vmem:[%s0] sm:$0xff]
    %v65 = vld [vmem:[%s0 + $0x8] sm:$0xff]
    %v66 = vld [vmem:[%s0 + $0x10] sm:$0xff]
    %v67 = vld [vmem:[%s0 + $0x18] sm:$0xff]
    %v68 = vld [vmem:[%s0 + $0x20] sm:$0xff]
    %v69 = vld [vmem:[%s0 + $0x28] sm:$0xff]
    %v70 = vld [vmem:[%s0 + $0x30] sm:$0xff]
    %v71 = vld [vmem:[%s0 + $0x38] sm:$0xff]
    %v72 = vld [vmem:[%s2] sm:$0xff]
    %v73 = vld [vmem:[%s2 + $0x8] sm:$0xff]
    %v74 = vld [vmem:[%s4] sm:$0x1]
    %v76 = vlaneseq
    %v77 = vshrl.u32 %v76, 7
    %v78 = vsub.s32 0, %v77
    %v79 = vrot.slane %v74, %v78
    %vm81 = vcmask 130048
    %v83 = vsel %vm81, %v64, 0
    %v86 = vsel %vm81, %v65, 0
    %v89 = vsel %vm81, %v66, 0
    %v92 = vsel %vm81, %v67, 0
    %v95 = vsel %vm81, %v68, 0
    %v98 = vsel %vm81, %v69, 0
    %v101 = vsel %vm81, %v70, 0
    %v104 = vsel %vm81, %v71, 0
    %106 = vmatprep.subr.mxu0 0.0
    %107 = vmatpush1.msra.mxu0 %v72
    %108 = vmatprep.subr.mxu0 0.0
    %109 = vmatpush1.msra.mxu0 %v73
    %110 = vmatprep.subr.mxu0 0.0
    %111 = vmatpush1.msra.mxu0 0.0
    %112 = vmatprep.subr.mxu0 0.0
    %113 = vmatpush1.msra.mxu0 0.0
    %114 = vmatprep.subr.mxu0 0.0
    %115 = vmatpush1.msra.mxu0 0.0
    %116 = vmatprep.subr.mxu0 0.0
    %117 = vmatpush1.msra.mxu0 0.0
    %118 = vmatprep.subr.mxu0 0.0
    %119 = vmatpush1.msra.mxu0 0.0
    %120 = vmatprep.subr.mxu0 0.0
    %121 = vmatpush1.msra.mxu0 0.0
    %122 = vmatprep.subr.mxu0 0.0
    %123 = vmatpush1.msra.mxu0 0.0
    %124 = vmatprep.subr.mxu0 0.0
    %125 = vmatpush1.msra.mxu0 0.0
    %126 = vmatprep.subr.mxu0 0.0
    %127 = vmatpush1.msra.mxu0 0.0
    %128 = vmatprep.subr.mxu0 0.0
    %129 = vmatpush1.msra.mxu0 0.0
    %130 = vmatprep.subr.mxu0 0.0
    %131 = vmatpush1.msra.mxu0 0.0
    %132 = vmatprep.subr.mxu0 0.0
    %133 = vmatpush1.msra.mxu0 0.0
    %134 = vmatprep.subr.mxu0 0.0
    %135 = vmatpush1.msra.mxu0 0.0
    %136 = vmatprep.subr.mxu0 0.0
    %137 = vmatpush1.msra.mxu0 0.0
    %138 = vmatprep.subr.mxu0 0.0
    %139 = vmatpush1.msra.mxu0 0.0
    %140 = vmatprep.subr.mxu0 0.0
    %141 = vmatpush1.msra.mxu0 0.0
    %142 = vmatprep.subr.mxu0 0.0
    %143 = vmatpush1.msra.mxu0 0.0
    %144 = vmatprep.subr.mxu0 0.0
    %145 = vmatpush1.msra.mxu0 0.0
    %146 = vmatprep.subr.mxu0 0.0
    %147 = vmatpush1.msra.mxu0 0.0
    %148 = vmatprep.subr.mxu0 0.0
    %149 = vmatpush1.msra.mxu0 0.0
    %150 = vmatprep.subr.mxu0 0.0
    %151 = vmatpush1.msra.mxu0 0.0
    %152 = vmatprep.subr.mxu0 0.0
    %153 = vmatpush1.msra.mxu0 0.0
    %154 = vmatprep.subr.mxu0 0.0
    %155 = vmatpush1.msra.mxu0 0.0
    %156 = vmatprep.subr.mxu0 0.0
    %157 = vmatpush1.msra.mxu0 0.0
    %158 = vmatprep.subr.mxu0 0.0
    %159 = vmatpush1.msra.mxu0 0.0
    %160 = vmatprep.subr.mxu0 0.0
    %161 = vmatpush1.msra.mxu0 0.0
    %162 = vmatprep.subr.mxu0 0.0
    %163 = vmatpush1.msra.mxu0 0.0
    %164 = vmatprep.subr.mxu0 0.0
    %165 = vmatpush1.msra.mxu0 0.0
    %166 = vmatprep.subr.mxu0 0.0
    %167 = vmatpush1.msra.mxu0 0.0
    %168 = vmatprep.subr.mxu0 0.0
    %169 = vmatpush1.msra.mxu0 0.0
    %170 = vmatprep.mubr.f32.mxu0 0.0
    %171 = vmatmul.mubr.f32.gmra.mrb[0].mxu0 %v83
    %v172 = vpop.f32.mrb[0].mxu0
    %v173 = vadd.f32 %v79, %v172
    %v174 = vpop.f32.mrb[0].mxu0
    %175 = vmatprep.mubr.f32.mxu0 0.0
    %176 = vmatmul.mubr.f32.gmra.mrb[0].mxu0 %v86
    %v177 = vpop.f32.mrb[0].mxu0
    %v178 = vadd.f32 %v79, %v177
    %v179 = vpop.f32.mrb[0].mxu0
    %180 = vmatprep.mubr.f32.mxu0 0.0
    %181 = vmatmul.mubr.f32.gmra.mrb[0].mxu0 %v89
    %v182 = vpop.f32.mrb[0].mxu0
    %v183 = vadd.f32 %v79, %v182
    %v184 = vpop.f32.mrb[0].mxu0
    %185 = vmatprep.mubr.f32.mxu0 0.0
    %186 = vmatmul.mubr.f32.gmra.mrb[0].mxu0 %v92
    %v187 = vpop.f32.mrb[0].mxu0
    %v188 = vadd.f32 %v79, %v187
    %v189 = vpop.f32.mrb[0].mxu0
    %190 = vmatprep.mubr.f32.mxu0 0.0
    %191 = vmatmul.mubr.f32.gmra.mrb[0].mxu0 %v95
    %v192 = vpop.f32.mrb[0].mxu0
    %v193 = vadd.f32 %v79, %v192
    %v194 = vpop.f32.mrb[0].mxu0
    %195 = vmatprep.mubr.f32.mxu0 0.0
    %196 = vmatmul.mubr.f32.gmra.mrb[0].mxu0 %v98
    %v197 = vpop.f32.mrb[0].mxu0
    %v198 = vadd.f32 %v79, %v197
    %v199 = vpop.f32.mrb[0].mxu0
    %200 = vmatprep.mubr.f32.mxu0 0.0
    %201 = vmatmul.mubr.f32.gmra.mrb[0].mxu0 %v101
    %v202 = vpop.f32.mrb[0].mxu0
    %v203 = vadd.f32 %v79, %v202
    %v204 = vpop.f32.mrb[0].mxu0
    %205 = vmatprep.mubr.f32.mxu0 0.0
    %206 = vmatmul.mubr.f32.gmra.mrb[0].mxu0 %v104
    %v207 = vpop.f32.mrb[0].mxu0
    %v208 = vadd.f32 %v79, %v207
    %v209 = vpop.f32.mrb[0].mxu0
    %210 = vdwg.mxu0
    %v211 = vld [vmem:[%s3] sm:$0xff]
    %v212 = vld [vmem:[%s3 + $0x8] sm:$0xff]
    %v214 = vsel %vm81, 0.0, 0
    %216 = vmatprep.subr.mxu0 0.0
    %217 = vmatpush1.msra.mxu0 %v211
    %218 = vmatprep.subr.mxu0 0.0
    %219 = vmatpush1.msra.mxu0 %v212
    %220 = vmatprep.subr.mxu0 0.0
    %221 = vmatpush1.msra.mxu0 0.0
    %222 = vmatprep.subr.mxu0 0.0
    %223 = vmatpush1.msra.mxu0 0.0
    %224 = vmatprep.subr.mxu0 0.0
    %225 = vmatpush1.msra.mxu0 0.0
    %226 = vmatprep.subr.mxu0 0.0
    %227 = vmatpush1.msra.mxu0 0.0
    %228 = vmatprep.subr.mxu0 0.0
    %229 = vmatpush1.msra.mxu0 0.0
    %230 = vmatprep.subr.mxu0 0.0
    %231 = vmatpush1.msra.mxu0 0.0
    %232 = vmatprep.subr.mxu0 0.0
    %233 = vmatpush1.msra.mxu0 0.0
    %234 = vmatprep.subr.mxu0 0.0
    %235 = vmatpush1.msra.mxu0 0.0
    %236 = vmatprep.subr.mxu0 0.0
    %237 = vmatpush1.msra.mxu0 0.0
    %238 = vmatprep.subr.mxu0 0.0
    %239 = vmatpush1.msra.mxu0 0.0
    %240 = vmatprep.subr.mxu0 0.0
    %241 = vmatpush1.msra.mxu0 0.0
    %242 = vmatprep.subr.mxu0 0.0
    %243 = vmatpush1.msra.mxu0 0.0
    %244 = vmatprep.subr.mxu0 0.0
    %245 = vmatpush1.msra.mxu0 0.0
    %246 = vmatprep.subr.mxu0 0.0
    %247 = vmatpush1.msra.mxu0 0.0
    %248 = vmatprep.subr.mxu0 0.0
    %249 = vmatpush1.msra.mxu0 0.0
    %250 = vmatprep.subr.mxu0 0.0
    %251 = vmatpush1.msra.mxu0 0.0
    %252 = vmatprep.subr.mxu0 0.0
    %253 = vmatpush1.msra.mxu0 0.0
    %254 = vmatprep.subr.mxu0 0.0
    %255 = vmatpush1.msra.mxu0 0.0
    %256 = vmatprep.subr.mxu0 0.0
    %257 = vmatpush1.msra.mxu0 0.0
    %258 = vmatprep.subr.mxu0 0.0
    %259 = vmatpush1.msra.mxu0 0.0
    %260 = vmatprep.subr.mxu0 0.0
    %261 = vmatpush1.msra.mxu0 0.0
    %262 = vmatprep.subr.mxu0 0.0
    %263 = vmatpush1.msra.mxu0 0.0
    %264 = vmatprep.subr.mxu0 0.0
    %265 = vmatpush1.msra.mxu0 0.0
    %266 = vmatprep.subr.mxu0 0.0
    %267 = vmatpush1.msra.mxu0 0.0
    %268 = vmatprep.subr.mxu0 0.0
    %269 = vmatpush1.msra.mxu0 0.0
    %270 = vmatprep.subr.mxu0 0.0
    %271 = vmatpush1.msra.mxu0 0.0
    %272 = vmatprep.subr.mxu0 0.0
    %273 = vmatpush1.msra.mxu0 0.0
    %274 = vmatprep.subr.mxu0 0.0
    %275 = vmatpush1.msra.mxu0 0.0
    %276 = vmatprep.subr.mxu0 0.0
    %277 = vmatpush1.msra.mxu0 0.0
    %278 = vmatprep.subr.mxu0 0.0
    %279 = vmatpush1.msra.mxu0 0.0
    %280 = vmatprep.mubr.f32.mxu0 0.0
    %281 = vmatmul.mubr.f32.gmra.mrb[0].mxu0 %v214
    %v282 = vpop.f32.mrb[0].mxu0
    %v283 = vadd.f32 0.0, %v282
    %v284 = vpop.f32.mrb[0].mxu0
    %285 = vdwg.mxu0
    %v286 = vadd.f32 %v173, %v283
    %v287 = vxor.u32 %v286, 2147483648
    %v288 = vmul.f32 %v287, 1.442695
    %v289 = vpow.pop %v288
    %v290 = vadd.f32 %v289, 1.0
    %v291 = vrcp.pop %v290
    %v292 = vmul.f32 1.0, %v291
    %v293 = vtanh.pop %v286
    %v294 = vmul.f32 %v292, 0.0
    %296 = vrot.lane.b32.xlu0 %v293, 96
    %v297 = vpop.permute.xlu0 %296
    %v299 = vmul.f32 %v292, %v297
    %301 = vrot.lane.b32.xlu0 %v299, 16
    %v302 = vpop.permute.xlu0 %301
    %v304 = vadd.f32 %v294, %v302
    %v305 = vtanh.pop %v304
    %307 = vrot.lane.b32.xlu0 %v305, 32
    %v308 = vpop.permute.xlu0 %307
    %v310 = vmul.f32 %v292, %v308
    %312 = vrot.lane.b32.xlu0 %v310, 80
    %v313 = vpop.permute.xlu0 %312
    %v314 = vsel %vm81, %v313, 0
    %316 = vmatprep.subr.mxu0 0.0
    %317 = vmatpush1.msra.mxu0 %v211
    %318 = vmatprep.subr.mxu0 0.0
    %319 = vmatpush1.msra.mxu0 %v212
    %320 = vmatprep.subr.mxu0 0.0
    %321 = vmatpush1.msra.mxu0 0.0
    %322 = vmatprep.subr.mxu0 0.0
    %323 = vmatpush1.msra.mxu0 0.0
    %324 = vmatprep.subr.mxu0 0.0
    %325 = vmatpush1.msra.mxu0 0.0
    %326 = vmatprep.subr.mxu0 0.0
    %327 = vmatpush1.msra.mxu0 0.0
    %328 = vmatprep.subr.mxu0 0.0
    %329 = vmatpush1.msra.mxu0 0.0
    %330 = vmatprep.subr.mxu0 0.0
    %331 = vmatpush1.msra.mxu0 0.0
    %332 = vmatprep.subr.mxu0 0.0
    %333 = vmatpush1.msra.mxu0 0.0
    %334 = vmatprep.subr.mxu0 0.0
    %335 = vmatpush1.msra.mxu0 0.0
    %336 = vmatprep.subr.mxu0 0.0
    %337 = vmatpush1.msra.mxu0 0.0
    %338 = vmatprep.subr.mxu0 0.0
    %339 = vmatpush1.msra.mxu0 0.0
    %340 = vmatprep.subr.mxu0 0.0
    %341 = vmatpush1.msra.mxu0 0.0
    %342 = vmatprep.subr.mxu0 0.0
    %343 = vmatpush1.msra.mxu0 0.0
    %344 = vmatprep.subr.mxu0 0.0
    %345 = vmatpush1.msra.mxu0 0.0
    %346 = vmatprep.subr.mxu0 0.0
    %347 = vmatpush1.msra.mxu0 0.0
    %348 = vmatprep.subr.mxu0 0.0
    %349 = vmatpush1.msra.mxu0 0.0
    %350 = vmatprep.subr.mxu0 0.0
    %351 = vmatpush1.msra.mxu0 0.0
    %352 = vmatprep.subr.mxu0 0.0
    %353 = vmatpush1.msra.mxu0 0.0
    %354 = vmatprep.subr.mxu0 0.0
    %355 = vmatpush1.msra.mxu0 0.0
    %356 = vmatprep.subr.mxu0 0.0
    %357 = vmatpush1.msra.mxu0 0.0
    %358 = vmatprep.subr.mxu0 0.0
    %359 = vmatpush1.msra.mxu0 0.0
    %360 = vmatprep.subr.mxu0 0.0
    %361 = vmatpush1.msra.mxu0 0.0
    %362 = vmatprep.subr.mxu0 0.0
    %363 = vmatpush1.msra.mxu0 0.0
    %364 = vmatprep.subr.mxu0 0.0
    %365 = vmatpush1.msra.mxu0 0.0
    %366 = vmatprep.subr.mxu0 0.0
    %367 = vmatpush1.msra.mxu0 0.0
    %368 = vmatprep.subr.mxu0 0.0
    %369 = vmatpush1.msra.mxu0 0.0
    %370 = vmatprep.subr.mxu0 0.0
    %371 = vmatpush1.msra.mxu0 0.0
    %372 = vmatprep.subr.mxu0 0.0
    %373 = vmatpush1.msra.mxu0 0.0
    %374 = vmatprep.subr.mxu0 0.0
    %375 = vmatpush1.msra.mxu0 0.0
    %376 = vmatprep.subr.mxu0 0.0
    %377 = vmatpush1.msra.mxu0 0.0
    %378 = vmatprep.subr.mxu0 0.0
    %379 = vmatpush1.msra.mxu0 0.0
    %380 = vmatprep.mubr.f32.mxu0 0.0
    %381 = vmatmul.mubr.f32.gmra.mrb[0].mxu0 %v314
    %v382 = vpop.f32.mrb[0].mxu0
    %v383 = vadd.f32 0.0, %v382
    %v384 = vpop.f32.mrb[0].mxu0
    %385 = vdwg.mxu0
    %v386 = vadd.f32 %v178, %v383
    %v387 = vxor.u32 %v386, 2147483648
    %v388 = vmul.f32 %v387, 1.442695
    %v389 = vpow.pop %v388
    %v390 = vadd.f32 %v389, 1.0
    %v391 = vrcp.pop %v390
    %v392 = vmul.f32 1.0, %v391
    %v393 = vtanh.pop %v386
    %v394 = vmul.f32 %v392, %v304
    %396 = vrot.lane.b32.xlu0 %v393, 96
    %v397 = vpop.permute.xlu0 %396
    %v399 = vmul.f32 %v392, %v397
    %401 = vrot.lane.b32.xlu0 %v399, 16
    %v402 = vpop.permute.xlu0 %401
    %v404 = vadd.f32 %v394, %v402
    %v405 = vtanh.pop %v404
    %407 = vrot.lane.b32.xlu0 %v405, 32
    %v408 = vpop.permute.xlu0 %407
    %v410 = vmul.f32 %v392, %v408
    %412 = vrot.lane.b32.xlu0 %v410, 80
    %v413 = vpop.permute.xlu0 %412
    %v414 = vsel %vm81, %v413, 0
    %416 = vmatprep.subr.mxu0 0.0
    %417 = vmatpush1.msra.mxu0 %v211
    %418 = vmatprep.subr.mxu0 0.0
    %419 = vmatpush1.msra.mxu0 %v212
    %420 = vmatprep.subr.mxu0 0.0
    %421 = vmatpush1.msra.mxu0 0.0
    %422 = vmatprep.subr.mxu0 0.0
    %423 = vmatpush1.msra.mxu0 0.0
    %424 = vmatprep.subr.mxu0 0.0
    %425 = vmatpush1.msra.mxu0 0.0
    %426 = vmatprep.subr.mxu0 0.0
    %427 = vmatpush1.msra.mxu0 0.0
    %428 = vmatprep.subr.mxu0 0.0
    %429 = vmatpush1.msra.mxu0 0.0
    %430 = vmatprep.subr.mxu0 0.0
    %431 = vmatpush1.msra.mxu0 0.0
    %432 = vmatprep.subr.mxu0 0.0
    %433 = vmatpush1.msra.mxu0 0.0
    %434 = vmatprep.subr.mxu0 0.0
    %435 = vmatpush1.msra.mxu0 0.0
    %436 = vmatprep.subr.mxu0 0.0
    %437 = vmatpush1.msra.mxu0 0.0
    %438 = vmatprep.subr.mxu0 0.0
    %439 = vmatpush1.msra.mxu0 0.0
    %440 = vmatprep.subr.mxu0 0.0
    %441 = vmatpush1.msra.mxu0 0.0
    %442 = vmatprep.subr.mxu0 0.0
    %443 = vmatpush1.msra.mxu0 0.0
    %444 = vmatprep.subr.mxu0 0.0
    %445 = vmatpush1.msra.mxu0 0.0
    %446 = vmatprep.subr.mxu0 0.0
    %447 = vmatpush1.msra.mxu0 0.0
    %448 = vmatprep.subr.mxu0 0.0
    %449 = vmatpush1.msra.mxu0 0.0
    %450 = vmatprep.subr.mxu0 0.0
    %451 = vmatpush1.msra.mxu0 0.0
    %452 = vmatprep.subr.mxu0 0.0
    %453 = vmatpush1.msra.mxu0 0.0
    %454 = vmatprep.subr.mxu0 0.0
    %455 = vmatpush1.msra.mxu0 0.0
    %456 = vmatprep.subr.mxu0 0.0
    %457 = vmatpush1.msra.mxu0 0.0
    %458 = vmatprep.subr.mxu0 0.0
    %459 = vmatpush1.msra.mxu0 0.0
    %460 = vmatprep.subr.mxu0 0.0
    %461 = vmatpush1.msra.mxu0 0.0
    %462 = vmatprep.subr.mxu0 0.0
    %463 = vmatpush1.msra.mxu0 0.0
    %464 = vmatprep.subr.mxu0 0.0
    %465 = vmatpush1.msra.mxu0 0.0
    %466 = vmatprep.subr.mxu0 0.0
    %467 = vmatpush1.msra.mxu0 0.0
    %468 = vmatprep.subr.mxu0 0.0
    %469 = vmatpush1.msra.mxu0 0.0
    %470 = vmatprep.subr.mxu0 0.0
    %471 = vmatpush1.msra.mxu0 0.0
    %472 = vmatprep.subr.mxu0 0.0
    %473 = vmatpush1.msra.mxu0 0.0
    %474 = vmatprep.subr.mxu0 0.0
    %475 = vmatpush1.msra.mxu0 0.0
    %476 = vmatprep.subr.mxu0 0.0
    %477 = vmatpush1.msra.mxu0 0.0
    %478 = vmatprep.subr.mxu0 0.0
    %479 = vmatpush1.msra.mxu0 0.0
    %480 = vmatprep.mubr.f32.mxu0 0.0
    %481 = vmatmul.mubr.f32.gmra.mrb[0].mxu0 %v414
    %v482 = vpop.f32.mrb[0].mxu0
    %v483 = vadd.f32 0.0, %v482
    %v484 = vpop.f32.mrb[0].mxu0
    %485 = vdwg.mxu0
    %v486 = vadd.f32 %v183, %v483
    %v487 = vxor.u32 %v486, 2147483648
    %v488 = vmul.f32 %v487, 1.442695
    %v489 = vpow.pop %v488
    %v490 = vadd.f32 %v489, 1.0
    %v491 = vrcp.pop %v490
    %v492 = vmul.f32 1.0, %v491
    %v493 = vtanh.pop %v486
    %v494 = vmul.f32 %v492, %v404
    %496 = vrot.lane.b32.xlu0 %v493, 96
    %v497 = vpop.permute.xlu0 %496
    %v499 = vmul.f32 %v492, %v497
    %501 = vrot.lane.b32.xlu0 %v499, 16
    %v502 = vpop.permute.xlu0 %501
    %v504 = vadd.f32 %v494, %v502
    %v505 = vtanh.pop %v504
    %507 = vrot.lane.b32.xlu0 %v505, 32
    %v508 = vpop.permute.xlu0 %507
    %v510 = vmul.f32 %v492, %v508
    %512 = vrot.lane.b32.xlu0 %v510, 80
    %v513 = vpop.permute.xlu0 %512
    %v514 = vsel %vm81, %v513, 0
    %516 = vmatprep.subr.mxu0 0.0
    %517 = vmatpush1.msra.mxu0 %v211
    %518 = vmatprep.subr.mxu0 0.0
    %519 = vmatpush1.msra.mxu0 %v212
    %520 = vmatprep.subr.mxu0 0.0
    %521 = vmatpush1.msra.mxu0 0.0
    %522 = vmatprep.subr.mxu0 0.0
    %523 = vmatpush1.msra.mxu0 0.0
    %524 = vmatprep.subr.mxu0 0.0
    %525 = vmatpush1.msra.mxu0 0.0
    %526 = vmatprep.subr.mxu0 0.0
    %527 = vmatpush1.msra.mxu0 0.0
    %528 = vmatprep.subr.mxu0 0.0
    %529 = vmatpush1.msra.mxu0 0.0
    %530 = vmatprep.subr.mxu0 0.0
    %531 = vmatpush1.msra.mxu0 0.0
    %532 = vmatprep.subr.mxu0 0.0
    %533 = vmatpush1.msra.mxu0 0.0
    %534 = vmatprep.subr.mxu0 0.0
    %535 = vmatpush1.msra.mxu0 0.0
    %536 = vmatprep.subr.mxu0 0.0
    %537 = vmatpush1.msra.mxu0 0.0
    %538 = vmatprep.subr.mxu0 0.0
    %539 = vmatpush1.msra.mxu0 0.0
    %540 = vmatprep.subr.mxu0 0.0
    %541 = vmatpush1.msra.mxu0 0.0
    %542 = vmatprep.subr.mxu0 0.0
    %543 = vmatpush1.msra.mxu0 0.0
    %544 = vmatprep.subr.mxu0 0.0
    %545 = vmatpush1.msra.mxu0 0.0
    %546 = vmatprep.subr.mxu0 0.0
    %547 = vmatpush1.msra.mxu0 0.0
    %548 = vmatprep.subr.mxu0 0.0
    %549 = vmatpush1.msra.mxu0 0.0
    %550 = vmatprep.subr.mxu0 0.0
    %551 = vmatpush1.msra.mxu0 0.0
    %552 = vmatprep.subr.mxu0 0.0
    %553 = vmatpush1.msra.mxu0 0.0
    %554 = vmatprep.subr.mxu0 0.0
    %555 = vmatpush1.msra.mxu0 0.0
    %556 = vmatprep.subr.mxu0 0.0
    %557 = vmatpush1.msra.mxu0 0.0
    %558 = vmatprep.subr.mxu0 0.0
    %559 = vmatpush1.msra.mxu0 0.0
    %560 = vmatprep.subr.mxu0 0.0
    %561 = vmatpush1.msra.mxu0 0.0
    %562 = vmatprep.subr.mxu0 0.0
    %563 = vmatpush1.msra.mxu0 0.0
    %564 = vmatprep.subr.mxu0 0.0
    %565 = vmatpush1.msra.mxu0 0.0
    %566 = vmatprep.subr.mxu0 0.0
    %567 = vmatpush1.msra.mxu0 0.0
    %568 = vmatprep.subr.mxu0 0.0
    %569 = vmatpush1.msra.mxu0 0.0
    %570 = vmatprep.subr.mxu0 0.0
    %571 = vmatpush1.msra.mxu0 0.0
    %572 = vmatprep.subr.mxu0 0.0
    %573 = vmatpush1.msra.mxu0 0.0
    %574 = vmatprep.subr.mxu0 0.0
    %575 = vmatpush1.msra.mxu0 0.0
    %576 = vmatprep.subr.mxu0 0.0
    %577 = vmatpush1.msra.mxu0 0.0
    %578 = vmatprep.subr.mxu0 0.0
    %579 = vmatpush1.msra.mxu0 0.0
    %580 = vmatprep.mubr.f32.mxu0 0.0
    %581 = vmatmul.mubr.f32.gmra.mrb[0].mxu0 %v514
    %v582 = vpop.f32.mrb[0].mxu0
    %v583 = vadd.f32 0.0, %v582
    %v584 = vpop.f32.mrb[0].mxu0
    %585 = vdwg.mxu0
    %v586 = vadd.f32 %v188, %v583
    %v587 = vxor.u32 %v586, 2147483648
    %v588 = vmul.f32 %v587, 1.442695
    %v589 = vpow.pop %v588
    %v590 = vadd.f32 %v589, 1.0
    %v591 = vrcp.pop %v590
    %v592 = vmul.f32 1.0, %v591
    %v593 = vtanh.pop %v586
    %v594 = vmul.f32 %v592, %v504
    %596 = vrot.lane.b32.xlu0 %v593, 96
    %v597 = vpop.permute.xlu0 %596
    %v599 = vmul.f32 %v592, %v597
    %601 = vrot.lane.b32.xlu0 %v599, 16
    %v602 = vpop.permute.xlu0 %601
    %v604 = vadd.f32 %v594, %v602
    %v605 = vtanh.pop %v604
    %607 = vrot.lane.b32.xlu0 %v605, 32
    %v608 = vpop.permute.xlu0 %607
    %v610 = vmul.f32 %v592, %v608
    %612 = vrot.lane.b32.xlu0 %v610, 80
    %v613 = vpop.permute.xlu0 %612
    %v614 = vsel %vm81, %v613, 0
    %616 = vmatprep.subr.mxu0 0.0
    %617 = vmatpush1.msra.mxu0 %v211
    %618 = vmatprep.subr.mxu0 0.0
    %619 = vmatpush1.msra.mxu0 %v212
    %620 = vmatprep.subr.mxu0 0.0
    %621 = vmatpush1.msra.mxu0 0.0
    %622 = vmatprep.subr.mxu0 0.0
    %623 = vmatpush1.msra.mxu0 0.0
    %624 = vmatprep.subr.mxu0 0.0
    %625 = vmatpush1.msra.mxu0 0.0
    %626 = vmatprep.subr.mxu0 0.0
    %627 = vmatpush1.msra.mxu0 0.0
    %628 = vmatprep.subr.mxu0 0.0
    %629 = vmatpush1.msra.mxu0 0.0
    %630 = vmatprep.subr.mxu0 0.0
    %631 = vmatpush1.msra.mxu0 0.0
    %632 = vmatprep.subr.mxu0 0.0
    %633 = vmatpush1.msra.mxu0 0.0
    %634 = vmatprep.subr.mxu0 0.0
    %635 = vmatpush1.msra.mxu0 0.0
    %636 = vmatprep.subr.mxu0 0.0
    %637 = vmatpush1.msra.mxu0 0.0
    %638 = vmatprep.subr.mxu0 0.0
    %639 = vmatpush1.msra.mxu0 0.0
    %640 = vmatprep.subr.mxu0 0.0
    %641 = vmatpush1.msra.mxu0 0.0
    %642 = vmatprep.subr.mxu0 0.0
    %643 = vmatpush1.msra.mxu0 0.0
    %644 = vmatprep.subr.mxu0 0.0
    %645 = vmatpush1.msra.mxu0 0.0
    %646 = vmatprep.subr.mxu0 0.0
    %647 = vmatpush1.msra.mxu0 0.0
    %648 = vmatprep.subr.mxu0 0.0
    %649 = vmatpush1.msra.mxu0 0.0
    %650 = vmatprep.subr.mxu0 0.0
    %651 = vmatpush1.msra.mxu0 0.0
    %652 = vmatprep.subr.mxu0 0.0
    %653 = vmatpush1.msra.mxu0 0.0
    %654 = vmatprep.subr.mxu0 0.0
    %655 = vmatpush1.msra.mxu0 0.0
    %656 = vmatprep.subr.mxu0 0.0
    %657 = vmatpush1.msra.mxu0 0.0
    %658 = vmatprep.subr.mxu0 0.0
    %659 = vmatpush1.msra.mxu0 0.0
    %660 = vmatprep.subr.mxu0 0.0
    %661 = vmatpush1.msra.mxu0 0.0
    %662 = vmatprep.subr.mxu0 0.0
    %663 = vmatpush1.msra.mxu0 0.0
    %664 = vmatprep.subr.mxu0 0.0
    %665 = vmatpush1.msra.mxu0 0.0
    %666 = vmatprep.subr.mxu0 0.0
    %667 = vmatpush1.msra.mxu0 0.0
    %668 = vmatprep.subr.mxu0 0.0
    %669 = vmatpush1.msra.mxu0 0.0
    %670 = vmatprep.subr.mxu0 0.0
    %671 = vmatpush1.msra.mxu0 0.0
    %672 = vmatprep.subr.mxu0 0.0
    %673 = vmatpush1.msra.mxu0 0.0
    %674 = vmatprep.subr.mxu0 0.0
    %675 = vmatpush1.msra.mxu0 0.0
    %676 = vmatprep.subr.mxu0 0.0
    %677 = vmatpush1.msra.mxu0 0.0
    %678 = vmatprep.subr.mxu0 0.0
    %679 = vmatpush1.msra.mxu0 0.0
    %680 = vmatprep.mubr.f32.mxu0 0.0
    %681 = vmatmul.mubr.f32.gmra.mrb[0].mxu0 %v614
    %v682 = vpop.f32.mrb[0].mxu0
    %v683 = vadd.f32 0.0, %v682
    %v684 = vpop.f32.mrb[0].mxu0
    %685 = vdwg.mxu0
    %v686 = vadd.f32 %v193, %v683
    %v687 = vxor.u32 %v686, 2147483648
    %v688 = vmul.f32 %v687, 1.442695
    %v689 = vpow.pop %v688
    %v690 = vadd.f32 %v689, 1.0
    %v691 = vrcp.pop %v690
    %v692 = vmul.f32 1.0, %v691
    %v693 = vtanh.pop %v686
    %v694 = vmul.f32 %v692, %v604
    %696 = vrot.lane.b32.xlu0 %v693, 96
    %v697 = vpop.permute.xlu0 %696
    %v699 = vmul.f32 %v692, %v697
    %701 = vrot.lane.b32.xlu0 %v699, 16
    %v702 = vpop.permute.xlu0 %701
    %v704 = vadd.f32 %v694, %v702
    %v705 = vtanh.pop %v704
    %707 = vrot.lane.b32.xlu0 %v705, 32
    %v708 = vpop.permute.xlu0 %707
    %v710 = vmul.f32 %v692, %v708
    %712 = vrot.lane.b32.xlu0 %v710, 80
    %v713 = vpop.permute.xlu0 %712
    %v714 = vsel %vm81, %v713, 0
    %716 = vmatprep.subr.mxu0 0.0
    %717 = vmatpush1.msra.mxu0 %v211
    %718 = vmatprep.subr.mxu0 0.0
    %719 = vmatpush1.msra.mxu0 %v212
    %720 = vmatprep.subr.mxu0 0.0
    %721 = vmatpush1.msra.mxu0 0.0
    %722 = vmatprep.subr.mxu0 0.0
    %723 = vmatpush1.msra.mxu0 0.0
    %724 = vmatprep.subr.mxu0 0.0
    %725 = vmatpush1.msra.mxu0 0.0
    %726 = vmatprep.subr.mxu0 0.0
    %727 = vmatpush1.msra.mxu0 0.0
    %728 = vmatprep.subr.mxu0 0.0
    %729 = vmatpush1.msra.mxu0 0.0
    %730 = vmatprep.subr.mxu0 0.0
    %731 = vmatpush1.msra.mxu0 0.0
    %732 = vmatprep.subr.mxu0 0.0
    %733 = vmatpush1.msra.mxu0 0.0
    %734 = vmatprep.subr.mxu0 0.0
    %735 = vmatpush1.msra.mxu0 0.0
    %736 = vmatprep.subr.mxu0 0.0
    %737 = vmatpush1.msra.mxu0 0.0
    %738 = vmatprep.subr.mxu0 0.0
    %739 = vmatpush1.msra.mxu0 0.0
    %740 = vmatprep.subr.mxu0 0.0
    %741 = vmatpush1.msra.mxu0 0.0
    %742 = vmatprep.subr.mxu0 0.0
    %743 = vmatpush1.msra.mxu0 0.0
    %744 = vmatprep.subr.mxu0 0.0
    %745 = vmatpush1.msra.mxu0 0.0
    %746 = vmatprep.subr.mxu0 0.0
    %747 = vmatpush1.msra.mxu0 0.0
    %748 = vmatprep.subr.mxu0 0.0
    %749 = vmatpush1.msra.mxu0 0.0
    %750 = vmatprep.subr.mxu0 0.0
    %751 = vmatpush1.msra.mxu0 0.0
    %752 = vmatprep.subr.mxu0 0.0
    %753 = vmatpush1.msra.mxu0 0.0
    %754 = vmatprep.subr.mxu0 0.0
    %755 = vmatpush1.msra.mxu0 0.0
    %756 = vmatprep.subr.mxu0 0.0
    %757 = vmatpush1.msra.mxu0 0.0
    %758 = vmatprep.subr.mxu0 0.0
    %759 = vmatpush1.msra.mxu0 0.0
    %760 = vmatprep.subr.mxu0 0.0
    %761 = vmatpush1.msra.mxu0 0.0
    %762 = vmatprep.subr.mxu0 0.0
    %763 = vmatpush1.msra.mxu0 0.0
    %764 = vmatprep.subr.mxu0 0.0
    %765 = vmatpush1.msra.mxu0 0.0
    %766 = vmatprep.subr.mxu0 0.0
    %767 = vmatpush1.msra.mxu0 0.0
    %768 = vmatprep.subr.mxu0 0.0
    %769 = vmatpush1.msra.mxu0 0.0
    %770 = vmatprep.subr.mxu0 0.0
    %771 = vmatpush1.msra.mxu0 0.0
    %772 = vmatprep.subr.mxu0 0.0
    %773 = vmatpush1.msra.mxu0 0.0
    %774 = vmatprep.subr.mxu0 0.0
    %775 = vmatpush1.msra.mxu0 0.0
    %776 = vmatprep.subr.mxu0 0.0
    %777 = vmatpush1.msra.mxu0 0.0
    %778 = vmatprep.subr.mxu0 0.0
    %779 = vmatpush1.msra.mxu0 0.0
    %780 = vmatprep.mubr.f32.mxu0 0.0
    %781 = vmatmul.mubr.f32.gmra.mrb[0].mxu0 %v714
    %v782 = vpop.f32.mrb[0].mxu0
    %v783 = vadd.f32 0.0, %v782
    %v784 = vpop.f32.mrb[0].mxu0
    %785 = vdwg.mxu0
    %v786 = vadd.f32 %v198, %v783
    %v787 = vxor.u32 %v786, 2147483648
    %v788 = vmul.f32 %v787, 1.442695
    %v789 = vpow.pop %v788
    %v790 = vadd.f32 %v789, 1.0
    %v791 = vrcp.pop %v790
    %v792 = vmul.f32 1.0, %v791
    %v793 = vtanh.pop %v786
    %v794 = vmul.f32 %v792, %v704
    %796 = vrot.lane.b32.xlu0 %v793, 96
    %v797 = vpop.permute.xlu0 %796
    %v799 = vmul.f32 %v792, %v797
    %801 = vrot.lane.b32.xlu0 %v799, 16
    %v802 = vpop.permute.xlu0 %801
    %v804 = vadd.f32 %v794, %v802
    %v805 = vtanh.pop %v804
    %807 = vrot.lane.b32.xlu0 %v805, 32
    %v808 = vpop.permute.xlu0 %807
    %v810 = vmul.f32 %v792, %v808
    %812 = vrot.lane.b32.xlu0 %v810, 80
    %v813 = vpop.permute.xlu0 %812
    %v814 = vsel %vm81, %v813, 0
    %816 = vmatprep.subr.mxu0 0.0
    %817 = vmatpush1.msra.mxu0 %v211
    %818 = vmatprep.subr.mxu0 0.0
    %819 = vmatpush1.msra.mxu0 %v212
    %820 = vmatprep.subr.mxu0 0.0
    %821 = vmatpush1.msra.mxu0 0.0
    %822 = vmatprep.subr.mxu0 0.0
    %823 = vmatpush1.msra.mxu0 0.0
    %824 = vmatprep.subr.mxu0 0.0
    %825 = vmatpush1.msra.mxu0 0.0
    %826 = vmatprep.subr.mxu0 0.0
    %827 = vmatpush1.msra.mxu0 0.0
    %828 = vmatprep.subr.mxu0 0.0
    %829 = vmatpush1.msra.mxu0 0.0
    %830 = vmatprep.subr.mxu0 0.0
    %831 = vmatpush1.msra.mxu0 0.0
    %832 = vmatprep.subr.mxu0 0.0
    %833 = vmatpush1.msra.mxu0 0.0
    %834 = vmatprep.subr.mxu0 0.0
    %835 = vmatpush1.msra.mxu0 0.0
    %836 = vmatprep.subr.mxu0 0.0
    %837 = vmatpush1.msra.mxu0 0.0
    %838 = vmatprep.subr.mxu0 0.0
    %839 = vmatpush1.msra.mxu0 0.0
    %840 = vmatprep.subr.mxu0 0.0
    %841 = vmatpush1.msra.mxu0 0.0
    %842 = vmatprep.subr.mxu0 0.0
    %843 = vmatpush1.msra.mxu0 0.0
    %844 = vmatprep.subr.mxu0 0.0
    %845 = vmatpush1.msra.mxu0 0.0
    %846 = vmatprep.subr.mxu0 0.0
    %847 = vmatpush1.msra.mxu0 0.0
    %848 = vmatprep.subr.mxu0 0.0
    %849 = vmatpush1.msra.mxu0 0.0
    %850 = vmatprep.subr.mxu0 0.0
    %851 = vmatpush1.msra.mxu0 0.0
    %852 = vmatprep.subr.mxu0 0.0
    %853 = vmatpush1.msra.mxu0 0.0
    %854 = vmatprep.subr.mxu0 0.0
    %855 = vmatpush1.msra.mxu0 0.0
    %856 = vmatprep.subr.mxu0 0.0
    %857 = vmatpush1.msra.mxu0 0.0
    %858 = vmatprep.subr.mxu0 0.0
    %859 = vmatpush1.msra.mxu0 0.0
    %860 = vmatprep.subr.mxu0 0.0
    %861 = vmatpush1.msra.mxu0 0.0
    %862 = vmatprep.subr.mxu0 0.0
    %863 = vmatpush1.msra.mxu0 0.0
    %864 = vmatprep.subr.mxu0 0.0
    %865 = vmatpush1.msra.mxu0 0.0
    %866 = vmatprep.subr.mxu0 0.0
    %867 = vmatpush1.msra.mxu0 0.0
    %868 = vmatprep.subr.mxu0 0.0
    %869 = vmatpush1.msra.mxu0 0.0
    %870 = vmatprep.subr.mxu0 0.0
    %871 = vmatpush1.msra.mxu0 0.0
    %872 = vmatprep.subr.mxu0 0.0
    %873 = vmatpush1.msra.mxu0 0.0
    %874 = vmatprep.subr.mxu0 0.0
    %875 = vmatpush1.msra.mxu0 0.0
    %876 = vmatprep.subr.mxu0 0.0
    %877 = vmatpush1.msra.mxu0 0.0
    %878 = vmatprep.subr.mxu0 0.0
    %879 = vmatpush1.msra.mxu0 0.0
    %880 = vmatprep.mubr.f32.mxu0 0.0
    %881 = vmatmul.mubr.f32.gmra.mrb[0].mxu0 %v814
    %v882 = vpop.f32.mrb[0].mxu0
    %v883 = vadd.f32 0.0, %v882
    %v884 = vpop.f32.mrb[0].mxu0
    %885 = vdwg.mxu0
    %v886 = vadd.f32 %v203, %v883
    %v887 = vxor.u32 %v886, 2147483648
    %v888 = vmul.f32 %v887, 1.442695
    %v889 = vpow.pop %v888
    %v890 = vadd.f32 %v889, 1.0
    %v891 = vrcp.pop %v890
    %v892 = vmul.f32 1.0, %v891
    %v893 = vtanh.pop %v886
    %v894 = vmul.f32 %v892, %v804
    %896 = vrot.lane.b32.xlu0 %v893, 96
    %v897 = vpop.permute.xlu0 %896
    %v899 = vmul.f32 %v892, %v897
    %901 = vrot.lane.b32.xlu0 %v899, 16
    %v902 = vpop.permute.xlu0 %901
    %v904 = vadd.f32 %v894, %v902
    %v905 = vtanh.pop %v904
    %907 = vrot.lane.b32.xlu0 %v905, 32
    %v908 = vpop.permute.xlu0 %907
    %v910 = vmul.f32 %v892, %v908
    %912 = vrot.lane.b32.xlu0 %v910, 80
    %v913 = vpop.permute.xlu0 %912
    %v914 = vsel %vm81, %v913, 0
    %916 = vmatprep.subr.mxu0 0.0
    %917 = vmatpush1.msra.mxu0 %v211
    %918 = vmatprep.subr.mxu0 0.0
    %919 = vmatpush1.msra.mxu0 %v212
    %920 = vmatprep.subr.mxu0 0.0
    %921 = vmatpush1.msra.mxu0 0.0
    %922 = vmatprep.subr.mxu0 0.0
    %923 = vmatpush1.msra.mxu0 0.0
    %924 = vmatprep.subr.mxu0 0.0
    %925 = vmatpush1.msra.mxu0 0.0
    %926 = vmatprep.subr.mxu0 0.0
    %927 = vmatpush1.msra.mxu0 0.0
    %928 = vmatprep.subr.mxu0 0.0
    %929 = vmatpush1.msra.mxu0 0.0
    %930 = vmatprep.subr.mxu0 0.0
    %931 = vmatpush1.msra.mxu0 0.0
    %932 = vmatprep.subr.mxu0 0.0
    %933 = vmatpush1.msra.mxu0 0.0
    %934 = vmatprep.subr.mxu0 0.0
    %935 = vmatpush1.msra.mxu0 0.0
    %936 = vmatprep.subr.mxu0 0.0
    %937 = vmatpush1.msra.mxu0 0.0
    %938 = vmatprep.subr.mxu0 0.0
    %939 = vmatpush1.msra.mxu0 0.0
    %940 = vmatprep.subr.mxu0 0.0
    %941 = vmatpush1.msra.mxu0 0.0
    %942 = vmatprep.subr.mxu0 0.0
    %943 = vmatpush1.msra.mxu0 0.0
    %944 = vmatprep.subr.mxu0 0.0
    %945 = vmatpush1.msra.mxu0 0.0
    %946 = vmatprep.subr.mxu0 0.0
    %947 = vmatpush1.msra.mxu0 0.0
    %948 = vmatprep.subr.mxu0 0.0
    %949 = vmatpush1.msra.mxu0 0.0
    %950 = vmatprep.subr.mxu0 0.0
    %951 = vmatpush1.msra.mxu0 0.0
    %952 = vmatprep.subr.mxu0 0.0
    %953 = vmatpush1.msra.mxu0 0.0
    %954 = vmatprep.subr.mxu0 0.0
    %955 = vmatpush1.msra.mxu0 0.0
    %956 = vmatprep.subr.mxu0 0.0
    %957 = vmatpush1.msra.mxu0 0.0
    %958 = vmatprep.subr.mxu0 0.0
    %959 = vmatpush1.msra.mxu0 0.0
    %960 = vmatprep.subr.mxu0 0.0
    %961 = vmatpush1.msra.mxu0 0.0
    %962 = vmatprep.subr.mxu0 0.0
    %963 = vmatpush1.msra.mxu0 0.0
    %964 = vmatprep.subr.mxu0 0.0
    %965 = vmatpush1.msra.mxu0 0.0
    %966 = vmatprep.subr.mxu0 0.0
    %967 = vmatpush1.msra.mxu0 0.0
    %968 = vmatprep.subr.mxu0 0.0
    %969 = vmatpush1.msra.mxu0 0.0
    %970 = vmatprep.subr.mxu0 0.0
    %971 = vmatpush1.msra.mxu0 0.0
    %972 = vmatprep.subr.mxu0 0.0
    %973 = vmatpush1.msra.mxu0 0.0
    %974 = vmatprep.subr.mxu0 0.0
    %975 = vmatpush1.msra.mxu0 0.0
    %976 = vmatprep.subr.mxu0 0.0
    %977 = vmatpush1.msra.mxu0 0.0
    %978 = vmatprep.subr.mxu0 0.0
    %979 = vmatpush1.msra.mxu0 0.0
    %980 = vmatprep.mubr.f32.mxu0 0.0
    %981 = vmatmul.mubr.f32.gmra.mrb[0].mxu0 %v914
    %v982 = vpop.f32.mrb[0].mxu0
    %v983 = vadd.f32 0.0, %v982
    %v984 = vpop.f32.mrb[0].mxu0
    %985 = vdwg.mxu0
    %v986 = vadd.f32 %v208, %v983
    %v987 = vxor.u32 %v986, 2147483648
    %v988 = vmul.f32 %v987, 1.442695
    %v989 = vpow.pop %v988
    %v990 = vadd.f32 %v989, 1.0
    %v991 = vrcp.pop %v990
    %v992 = vmul.f32 1.0, %v991
    %v993 = vtanh.pop %v986
    %v994 = vmul.f32 %v992, %v904
    %996 = vrot.lane.b32.xlu0 %v993, 96
    %v997 = vpop.permute.xlu0 %996
    %v999 = vmul.f32 %v992, %v997
    %1001 = vrot.lane.b32.xlu0 %v999, 16
    %v1002 = vpop.permute.xlu0 %1001
    %v1004 = vadd.f32 %v994, %v1002
    %v1005 = vtanh.pop %v1004
    %1007 = vrot.lane.b32.xlu0 %v1005, 32
    %v1008 = vpop.permute.xlu0 %1007
    %v1010 = vmul.f32 %v992, %v1008
    %v1011 = vld [vmem:[%s1] sm:$0xff]
    %v1012 = vld [vmem:[%s1 + $0x8] sm:$0xff]
    %v1013 = vld [vmem:[#allocation2] sm:$0xff]
    %v1014 = vld [vmem:[#allocation2 + $0x8] sm:$0xff]
    %v1015 = vld [vmem:[#allocation2 + $0x10] sm:$0xff]
    %v1016 = vld [vmem:[#allocation2 + $0x18] sm:$0xff]
    %v1017 = vld [vmem:[#allocation2 + $0x20] sm:$0xff]
    %v1018 = vld [vmem:[#allocation2 + $0x28] sm:$0xff]
    %v1019 = vld [vmem:[#allocation2 + $0x30] sm:$0xff]
    %v1020 = vld [vmem:[#allocation2 + $0x38] sm:$0xff]
    %v1021 = vld [vmem:[#allocation2 + $0x40] sm:$0xff]
    %v1022 = vld [vmem:[#allocation2 + $0x48] sm:$0xff]
    %v1023 = vld [vmem:[#allocation2 + $0x50] sm:$0xff]
    %v1024 = vld [vmem:[#allocation2 + $0x58] sm:$0xff]
    %v1025 = vld [vmem:[#allocation2 + $0x60] sm:$0xff]
    %v1026 = vld [vmem:[#allocation2 + $0x68] sm:$0xff]
    %v1027 = vld [vmem:[#allocation2 + $0x70] sm:$0xff]
    %v1028 = vld [vmem:[#allocation2 + $0x78] sm:$0xff]
    %v1029 = vld [vmem:[#allocation2 + $0x80] sm:$0xff]
    %v1030 = vld [vmem:[#allocation2 + $0x88] sm:$0xff]
    %v1031 = vld [vmem:[#allocation2 + $0x90] sm:$0xff]
    %v1032 = vld [vmem:[#allocation2 + $0x98] sm:$0xff]
    %v1033 = vld [vmem:[#allocation2 + $0xa0] sm:$0xff]
    %v1034 = vld [vmem:[#allocation2 + $0xa8] sm:$0xff]
    %v1035 = vld [vmem:[#allocation2 + $0xb0] sm:$0xff]
    %v1036 = vld [vmem:[#allocation2 + $0xb8] sm:$0xff]
    %v1037 = vld [vmem:[#allocation2 + $0xc0] sm:$0xff]
    %v1038 = vld [vmem:[#allocation2 + $0xc8] sm:$0xff]
    %v1039 = vld [vmem:[#allocation2 + $0xd0] sm:$0xff]
    %v1040 = vld [vmem:[#allocation2 + $0xd8] sm:$0xff]
    %v1041 = vld [vmem:[#allocation2 + $0xe0] sm:$0xff]
    %v1042 = vld [vmem:[#allocation2 + $0xe8] sm:$0xff]
    %v1043 = vld [vmem:[#allocation2 + $0xf0] sm:$0xff]
    %v1044 = vld [vmem:[#allocation2 + $0xf8] sm:$0xff]
    %v1045 = vld [vmem:[%s6] sm:$0xff]
    %v1046 = vld [vmem:[%s6 + $0x8] sm:$0xff]
    %1048 = vrot.lane.b32.xlu0 %v1010, 80
    %v1049 = vpop.permute.xlu0 %1048
    %v1050 = vsel %vm81, %v1049, 0
    %1052 = vmatprep.subr.mxu0 0.0
    %1053 = vmatpush1.msra.mxu0 %v1045
    %1054 = vmatprep.subr.mxu0 0.0
    %1055 = vmatpush1.msra.mxu0 %v1046
    %1056 = vmatprep.subr.mxu0 0.0
    %1057 = vmatpush1.msra.mxu0 0.0
    %1058 = vmatprep.subr.mxu0 0.0
    %1059 = vmatpush1.msra.mxu0 0.0
    %1060 = vmatprep.subr.mxu0 0.0
    %1061 = vmatpush1.msra.mxu0 0.0
    %1062 = vmatprep.subr.mxu0 0.0
    %1063 = vmatpush1.msra.mxu0 0.0
    %1064 = vmatprep.subr.mxu0 0.0
    %1065 = vmatpush1.msra.mxu0 0.0
    %1066 = vmatprep.subr.mxu0 0.0
    %1067 = vmatpush1.msra.mxu0 0.0
    %1068 = vmatprep.subr.mxu0 0.0
    %1069 = vmatpush1.msra.mxu0 0.0
    %1070 = vmatprep.subr.mxu0 0.0
    %1071 = vmatpush1.msra.mxu0 0.0
    %1072 = vmatprep.subr.mxu0 0.0
    %1073 = vmatpush1.msra.mxu0 0.0
    %1074 = vmatprep.subr.mxu0 0.0
    %1075 = vmatpush1.msra.mxu0 0.0
    %1076 = vmatprep.subr.mxu0 0.0
    %1077 = vmatpush1.msra.mxu0 0.0
    %1078 = vmatprep.subr.mxu0 0.0
    %1079 = vmatpush1.msra.mxu0 0.0
    %1080 = vmatprep.subr.mxu0 0.0
    %1081 = vmatpush1.msra.mxu0 0.0
    %1082 = vmatprep.subr.mxu0 0.0
    %1083 = vmatpush1.msra.mxu0 0.0
    %1084 = vmatprep.subr.mxu0 0.0
    %1085 = vmatpush1.msra.mxu0 0.0
    %1086 = vmatprep.subr.mxu0 0.0
    %1087 = vmatpush1.msra.mxu0 0.0
    %1088 = vmatprep.subr.mxu0 0.0
    %1089 = vmatpush1.msra.mxu0 0.0
    %1090 = vmatprep.subr.mxu0 0.0
    %1091 = vmatpush1.msra.mxu0 0.0
    %1092 = vmatprep.subr.mxu0 0.0
    %1093 = vmatpush1.msra.mxu0 0.0
    %1094 = vmatprep.subr.mxu0 0.0
    %1095 = vmatpush1.msra.mxu0 0.0
    %1096 = vmatprep.subr.mxu0 0.0
    %1097 = vmatpush1.msra.mxu0 0.0
    %1098 = vmatprep.subr.mxu0 0.0
    %1099 = vmatpush1.msra.mxu0 0.0
    %1100 = vmatprep.subr.mxu0 0.0
    %1101 = vmatpush1.msra.mxu0 0.0
    %1102 = vmatprep.subr.mxu0 0.0
    %1103 = vmatpush1.msra.mxu0 0.0
    %1104 = vmatprep.subr.mxu0 0.0
    %1105 = vmatpush1.msra.mxu0 0.0
    %1106 = vmatprep.subr.mxu0 0.0
    %1107 = vmatpush1.msra.mxu0 0.0
    %1108 = vmatprep.subr.mxu0 0.0
    %1109 = vmatpush1.msra.mxu0 0.0
    %1110 = vmatprep.subr.mxu0 0.0
    %1111 = vmatpush1.msra.mxu0 0.0
    %1112 = vmatprep.subr.mxu0 0.0
    %1113 = vmatpush1.msra.mxu0 0.0
    %1114 = vmatprep.subr.mxu0 0.0
    %1115 = vmatpush1.msra.mxu0 0.0
    %1116 = vmatprep.mubr.f32.mxu0 0.0
    %1117 = vmatmul.mubr.f32.gmra.mrb[0].mxu0 %v1050
    %v1118 = vpop.f32.mrb[0].mxu0
    %v1119 = vadd.f32 0.0, %v1118
    %v1120 = vpop.f32.mrb[0].mxu0
    %1121 = vdwg.mxu0
    %1122 = vmatprep.subr.mxu0 0.0
    %1123 = vmatpush1.msra.mxu0 %v1013
    %1124 = vmatprep.subr.mxu0 0.0
    %1125 = vmatpush1.msra.mxu0 %v1014
    %1126 = vmatprep.subr.mxu0 0.0
    %1127 = vmatpush1.msra.mxu0 %v1015
    %1128 = vmatprep.subr.mxu0 0.0
    %1129 = vmatpush1.msra.mxu0 %v1016
    %1130 = vmatprep.subr.mxu0 0.0
    %1131 = vmatpush1.msra.mxu0 %v1017
    %1132 = vmatprep.subr.mxu0 0.0
    %1133 = vmatpush1.msra.mxu0 %v1018
    %1134 = vmatprep.subr.mxu0 0.0
    %1135 = vmatpush1.msra.mxu0 %v1019
    %1136 = vmatprep.subr.mxu0 0.0
    %1137 = vmatpush1.msra.mxu0 %v1020
    %1138 = vmatprep.subr.mxu0 0.0
    %1139 = vmatpush1.msra.mxu0 %v1021
    %1140 = vmatprep.subr.mxu0 0.0
    %1141 = vmatpush1.msra.mxu0 %v1022
    %1142 = vmatprep.subr.mxu0 0.0
    %1143 = vmatpush1.msra.mxu0 %v1023
    %1144 = vmatprep.subr.mxu0 0.0
    %1145 = vmatpush1.msra.mxu0 %v1024
    %1146 = vmatprep.subr.mxu0 0.0
    %1147 = vmatpush1.msra.mxu0 %v1025
    %1148 = vmatprep.subr.mxu0 0.0
    %1149 = vmatpush1.msra.mxu0 %v1026
    %1150 = vmatprep.subr.mxu0 0.0
    %1151 = vmatpush1.msra.mxu0 %v1027
    %1152 = vmatprep.subr.mxu0 0.0
    %1153 = vmatpush1.msra.mxu0 %v1028
    %1154 = vmatprep.subr.mxu0 0.0
    %1155 = vmatpush1.msra.mxu0 %v1029
    %1156 = vmatprep.subr.mxu0 0.0
    %1157 = vmatpush1.msra.mxu0 %v1030
    %1158 = vmatprep.subr.mxu0 0.0
    %1159 = vmatpush1.msra.mxu0 %v1031
    %1160 = vmatprep.subr.mxu0 0.0
    %1161 = vmatpush1.msra.mxu0 %v1032
    %1162 = vmatprep.subr.mxu0 0.0
    %1163 = vmatpush1.msra.mxu0 %v1033
    %1164 = vmatprep.subr.mxu0 0.0
    %1165 = vmatpush1.msra.mxu0 %v1034
    %1166 = vmatprep.subr.mxu0 0.0
    %1167 = vmatpush1.msra.mxu0 %v1035
    %1168 = vmatprep.subr.mxu0 0.0
    %1169 = vmatpush1.msra.mxu0 %v1036
    %1170 = vmatprep.subr.mxu0 0.0
    %1171 = vmatpush1.msra.mxu0 %v1037
    %1172 = vmatprep.subr.mxu0 0.0
    %1173 = vmatpush1.msra.mxu0 %v1038
    %1174 = vmatprep.subr.mxu0 0.0
    %1175 = vmatpush1.msra.mxu0 %v1039
    %1176 = vmatprep.subr.mxu0 0.0
    %1177 = vmatpush1.msra.mxu0 %v1040
    %1178 = vmatprep.subr.mxu0 0.0
    %1179 = vmatpush1.msra.mxu0 %v1041
    %1180 = vmatprep.subr.mxu0 0.0
    %1181 = vmatpush1.msra.mxu0 %v1042
    %1182 = vmatprep.subr.mxu0 0.0
    %1183 = vmatpush1.msra.mxu0 %v1043
    %1184 = vmatprep.subr.mxu0 0.0
    %1185 = vmatpush1.msra.mxu0 %v1044
    %1186 = vmatprep.mubr.f32.mxu0 %v1012
    %1187 = vmatmul.mubr.f32.gmra.mrb[0].mxu0 %v1011
    %v1188 = vpop.f32.mrb[0].mxu0
    %v1189 = vadd.f32 %v1119, %v1188
    %v1190 = vpop.f32.mrb[0].mxu0
    %1191 = vdwg.mxu0
    %v1192 = vld [vmem:[%s7] sm:$0x1]
    %v1194 = vlaneseq
    %v1195 = vshrl.u32 %v1194, 7
    %v1196 = vsub.s32 0, %v1195
    %v1197 = vrot.slane %v1192, %v1196
    %v1199 = vadd.f32 %v1189, %v1197
    %v1200 = vmax.f32 %v1199, 0.0
    %v1201 = vld [vmem:[#allocation5] sm:$0xff]
    %v1202 = vld [vmem:[#allocation5 + $0x8] sm:$0xff]
    %v1203 = vld [vmem:[#allocation5 + $0x10] sm:$0xff]
    %v1204 = vld [vmem:[#allocation5 + $0x18] sm:$0xff]
    %v1205 = vld [vmem:[#allocation5 + $0x20] sm:$0xff]
    %v1206 = vld [vmem:[#allocation5 + $0x28] sm:$0xff]
    %v1207 = vld [vmem:[#allocation5 + $0x30] sm:$0xff]
    %v1208 = vld [vmem:[#allocation5 + $0x38] sm:$0xff]
    %v1209 = vld [vmem:[#allocation5 + $0x40] sm:$0xff]
    %v1210 = vld [vmem:[#allocation5 + $0x48] sm:$0xff]
    %v1211 = vld [vmem:[#allocation5 + $0x50] sm:$0xff]
    %v1212 = vld [vmem:[#allocation5 + $0x58] sm:$0xff]
    %v1213 = vld [vmem:[#allocation5 + $0x60] sm:$0xff]
    %v1214 = vld [vmem:[#allocation5 + $0x68] sm:$0xff]
    %v1215 = vld [vmem:[#allocation5 + $0x70] sm:$0xff]
    %v1216 = vld [vmem:[#allocation5 + $0x78] sm:$0xff]
    %v1217 = vld [vmem:[%s9] sm:$0x1]
    %v1219 = vlaneseq
    %v1220 = vshrl.u32 %v1219, 7
    %v1221 = vsub.s32 0, %v1220
    %v1222 = vrot.slane %v1217, %v1221
    %1224 = vmatprep.subr.mxu0 0.0
    %1225 = vmatpush1.msra.mxu0 %v1201
    %1226 = vmatprep.subr.mxu0 0.0
    %1227 = vmatpush1.msra.mxu0 %v1202
    %1228 = vmatprep.subr.mxu0 0.0
    %1229 = vmatpush1.msra.mxu0 %v1203
    %1230 = vmatprep.subr.mxu0 0.0
    %1231 = vmatpush1.msra.mxu0 %v1204
    %1232 = vmatprep.subr.mxu0 0.0
    %1233 = vmatpush1.msra.mxu0 %v1205
    %1234 = vmatprep.subr.mxu0 0.0
    %1235 = vmatpush1.msra.mxu0 %v1206
    %1236 = vmatprep.subr.mxu0 0.0
    %1237 = vmatpush1.msra.mxu0 %v1207
    %1238 = vmatprep.subr.mxu0 0.0
    %1239 = vmatpush1.msra.mxu0 %v1208
    %1240 = vmatprep.subr.mxu0 0.0
    %1241 = vmatpush1.msra.mxu0 %v1209
    %1242 = vmatprep.subr.mxu0 0.0
    %1243 = vmatpush1.msra.mxu0 %v1210
    %1244 = vmatprep.subr.mxu0 0.0
    %1245 = vmatpush1.msra.mxu0 %v1211
    %1246 = vmatprep.subr.mxu0 0.0
    %1247 = vmatpush1.msra.mxu0 %v1212
    %1248 = vmatprep.subr.mxu0 0.0
    %1249 = vmatpush1.msra.mxu0 %v1213
    %1250 = vmatprep.subr.mxu0 0.0
    %1251 = vmatpush1.msra.mxu0 %v1214
    %1252 = vmatprep.subr.mxu0 0.0
    %1253 = vmatpush1.msra.mxu0 %v1215
    %1254 = vmatprep.subr.mxu0 0.0
    %1255 = vmatpush1.msra.mxu0 %v1216
    %1256 = vmatprep.subr.mxu0 0.0
    %1257 = vmatpush1.msra.mxu0 0.0
    %1258 = vmatprep.subr.mxu0 0.0
    %1259 = vmatpush1.msra.mxu0 0.0
    %1260 = vmatprep.subr.mxu0 0.0
    %1261 = vmatpush1.msra.mxu0 0.0
    %1262 = vmatprep.subr.mxu0 0.0
    %1263 = vmatpush1.msra.mxu0 0.0
    %1264 = vmatprep.subr.mxu0 0.0
    %1265 = vmatpush1.msra.mxu0 0.0
    %1266 = vmatprep.subr.mxu0 0.0
    %1267 = vmatpush1.msra.mxu0 0.0
    %1268 = vmatprep.subr.mxu0 0.0
    %1269 = vmatpush1.msra.mxu0 0.0
    %1270 = vmatprep.subr.mxu0 0.0
    %1271 = vmatpush1.msra.mxu0 0.0
    %1272 = vmatprep.subr.mxu0 0.0
    %1273 = vmatpush1.msra.mxu0 0.0
    %1274 = vmatprep.subr.mxu0 0.0
    %1275 = vmatpush1.msra.mxu0 0.0
    %1276 = vmatprep.subr.mxu0 0.0
    %1277 = vmatpush1.msra.mxu0 0.0
    %1278 = vmatprep.subr.mxu0 0.0
    %1279 = vmatpush1.msra.mxu0 0.0
    %1280 = vmatprep.subr.mxu0 0.0
    %1281 = vmatpush1.msra.mxu0 0.0
    %1282 = vmatprep.subr.mxu0 0.0
    %1283 = vmatpush1.msra.mxu0 0.0
    %1284 = vmatprep.subr.mxu0 0.0
    %1285 = vmatpush1.msra.mxu0 0.0
    %1286 = vmatprep.subr.mxu0 0.0
    %1287 = vmatpush1.msra.mxu0 0.0
    %1288 = vmatprep.mubr.f32.mxu0 0.0
    %1289 = vmatmul.mubr.f32.gmra.mrb[0].mxu0 %v1200
    %v1290 = vpop.f32.mrb[0].mxu0
    %v1291 = vadd.f32 %v1222, %v1290
    %v1292 = vpop.f32.mrb[0].mxu0
    %1293 = vdwg.mxu0
    %1294 = vst [vmem:[#allocation7] sm:$0xff] %v1291
    // Predicated region
    $region50: #{tpu_custom_call.1} parent=1 // pred_check
      _
    $region51: #{tpu_custom_call.1} parent=1 // pred_check_branch
      %1296 = sbr.rel (0) target = $region53
    $region52: #{tpu_custom_call.1} parent=1 // pred_region
      %s1298 = ssub.s32 128, 128
      %1299 = vsyncadd [#allocation4], %s1298
      %s1301 = sshll.u32 [#allocation7], 4
      %s1302 = int_to_ptr.vmem [resolvable:$true] %s1301
      %1304 = dma.vmem_to_hbm [thread:$0]  %s1302, 128, %s10, [#allocation4]
    $region53: #{tpu_custom_call.1} parent=1 // pred_fallthru
      _
    // Predicated region
    $region54: #{tpu_custom_call.1} parent=1 // pred_check
      _
    $region55: #{tpu_custom_call.1} parent=1 // pred_check_branch
      %1306 = sbr.rel (0) target = $region57
    $region56: #{tpu_custom_call.1} parent=1 // pred_region
      %1307 = dma.done [#allocation4], 128
    $region57: #{tpu_custom_call.1} parent=1 // pred_fallthru
      _
    %1308 = vsyncpa [#allocation3], 1
    %1309 = vsyncpa [#allocation6], 1
    %1310 = vsyncpa [#allocation4], 1

</llo_original>
